<compile_context>
chip_gen: v7x
topology: tpu7x:2x2x1
jax: 0.10.0
libtpu: 0.0.40
codegen_flags: <defaults>
</compile_context>

<pallas_src>
import functools
from typing import NamedTuple

import jax
import jax.numpy as jnp
from jax import lax
from jax.experimental import pallas as pl
from jax.experimental.pallas import tpu as pltpu


def _round_up(x, m):
    return ((x + m - 1) // m) * m


class MMoEMeta(NamedTuple):
    num_experts: int
    hidden: int
    hyper_dim: int
    mlp_dim: int
    out_dim: int
    Gp: int
    Dp: int
    Hpk: int
    Op: int
    Ep: int


# ----------------------------- Pallas kernel ------------------------------- #
def _mmoe_kernel(hyper_ref, mlpx_ref, gate_ref, sel_ref, b4m_ref,
                 w1_ref, b1_ref, w2_ref, b2_ref, w3_ref, b3_ref, w4_ref,
                 out_ref, *, num_experts):
    f32 = jnp.float32
    bf16 = jnp.bfloat16

    # ---- gating: one-hot gather expressed as (hyper != 0) @ gate_param ----
    hmask = (hyper_ref[...] != 0).astype(f32)                      # (TB, Gp)
    logits = jnp.dot(hmask, gate_ref[...],
                     preferred_element_type=f32)                   # (TB, Ep)
    lane = lax.broadcasted_iota(jnp.int32, logits.shape, 1)
    valid = lane < num_experts
    m = jnp.max(jnp.where(valid, logits, -jnp.inf), axis=1, keepdims=True)
    p = jnp.where(valid, jnp.exp(logits - m), 0.0)                 # pad lanes -> 0
    gates = p / jnp.sum(p, axis=1, keepdims=True)                  # (TB, Ep)

    # expand gates across the lane-packed hidden and fold the per-expert
    # output bias (sum_e g_e * b4_e) via small f32 matmuls.
    g_exp = jnp.dot(gates, sel_ref[...], preferred_element_type=f32)   # (TB, Hpk)
    gate_bias = jnp.dot(gates, b4m_ref[...], preferred_element_type=f32)  # (TB, Op)

    # ---- lane-packed experts: bf16 matmuls, f32 accumulation ----
    x = mlpx_ref[...]                                              # bf16 (TB, Dp)
    h = jnp.dot(x, w1_ref[...], preferred_element_type=f32) + b1_ref[...]
    h = jnp.maximum(h, 0.0).astype(bf16)
    h = jnp.dot(h, w2_ref[...], preferred_element_type=f32) + b2_ref[...]
    h = jnp.maximum(h, 0.0).astype(bf16)
    h = jnp.dot(h, w3_ref[...], preferred_element_type=f32) + b3_ref[...]
    h = jnp.maximum(h, 0.0)
    h = (h * g_exp).astype(bf16)                                   # fold gate pre-w4
    out_ref[...] = (jnp.dot(h, w4_ref[...], preferred_element_type=f32)
                    + gate_bias)


# ---------------------- one-time weight packing (init) ---------------------- #
def pack_mmoe_params(params):
    """Pad + lane-pack the expert weights once, outside the forward path."""
    gate = params["gate"].astype(jnp.float32)
    w1 = params["w1"].astype(jnp.float32)
    w2 = params["w2"].astype(jnp.float32)
    w3 = params["w3"].astype(jnp.float32)
    w4 = params["w4"].astype(jnp.float32)
    b1 = params["b1"].astype(jnp.float32)
    b2 = params["b2"].astype(jnp.float32)
    b3 = params["b3"].astype(jnp.float32)
    b4 = params["b4"].astype(jnp.float32)

    E, D, H = w1.shape
    O = w4.shape[2]
    G = gate.shape[0]
    EH = E * H
    Gp, Dp, Op = _round_up(G, 128), _round_up(D, 128), _round_up(O, 128)
    Ep = _round_up(E, 128)
    Hpk = _round_up(EH, 128)   # lane-packed hidden (block-diag w2/w3)

    gate_p = jnp.zeros((Gp, Ep), jnp.float32).at[:G, :E].set(gate)

    # selection matrix: packed-hidden lane e*H+t belongs to expert e
    sel = jnp.zeros((Ep, Hpk), jnp.float32)
    for e in range(E):
        sel = sel.at[e, e * H:(e + 1) * H].set(1.0)

    # gate-weighted output bias matrix
    b4m = jnp.zeros((Ep, Op), jnp.float32).at[:E, :O].set(b4)

    # w1: (E, D, H) -> (D, E*H) column-concat
    w1_cat = jnp.transpose(w1, (1, 0, 2)).reshape(D, EH)
    w1_p = jnp.zeros((Dp, Hpk), jnp.bfloat16).at[:D, :EH].set(
        w1_cat.astype(jnp.bfloat16))

    def bdiag(w):
        out = jnp.zeros((Hpk, Hpk), jnp.bfloat16)
        for e in range(E):
            out = out.at[e * H:(e + 1) * H, e * H:(e + 1) * H].set(
                w[e].astype(jnp.bfloat16))
        return out

    w2_p = bdiag(w2)
    w3_p = bdiag(w3)

    # w4: (E, H, O) -> (E*H, O) row-concat
    w4_p = jnp.zeros((Hpk, Op), jnp.bfloat16).at[:EH, :O].set(
        w4.reshape(EH, O).astype(jnp.bfloat16))

    def pack_bias(b, width):
        return jnp.zeros((1, width), jnp.float32).at[0, :b.size].set(b.reshape(-1))

    packed = {
        "gate": gate_p, "sel": sel, "b4mat": b4m,
        "w1": w1_p, "b1": pack_bias(b1, Hpk),
        "w2": w2_p, "b2": pack_bias(b2, Hpk),
        "w3": w3_p, "b3": pack_bias(b3, Hpk),
        "w4": w4_p,
    }
    meta = MMoEMeta(num_experts=E, hidden=H, hyper_dim=G, mlp_dim=D, out_dim=O,
                    Gp=Gp, Dp=Dp, Hpk=Hpk, Op=Op, Ep=Ep)
    return packed, meta


# ------------------------------- forward ------------------------------------ #
@functools.partial(jax.jit, static_argnames=("meta",))
def mmoe_pallas(hyper_x, mlp_x, packed, meta):
    base_shape = hyper_x.shape[:-1]
    hx = hyper_x.reshape(-1, meta.hyper_dim).astype(jnp.float32)
    mx = mlp_x.reshape(-1, meta.mlp_dim)
    B = hx.shape[0]

    # batch tile: >=256 rows to fill the 256x256 MXU (v6e/v7x), capped so that
    # double-buffered activation tiles stay well under v7x's 64 MiB VMEM.
    TB = min(512, _round_up(max(B, 1), 256))
    Bp = _round_up(B, TB)
    grid = (Bp // TB,)

    hx_p = jnp.zeros((Bp, meta.Gp), jnp.float32).at[:B, :meta.hyper_dim].set(hx)
    mx_p = jnp.zeros((Bp, meta.Dp), jnp.bfloat16).at[:B, :meta.mlp_dim].set(
        mx.astype(jnp.bfloat16))

    def act_spec(width):
        return pl.BlockSpec((TB, width), lambda i: (i, 0))

    def const_spec(shape):
        return pl.BlockSpec(shape, lambda i: (0, 0))

    out_p = pl.pallas_call(
        functools.partial(_mmoe_kernel, num_experts=meta.num_experts),
        out_shape=jax.ShapeDtypeStruct((Bp, meta.Op), jnp.float32),
        grid=grid,
        in_specs=[
            act_spec(meta.Gp),                       # hyper tile
            act_spec(meta.Dp),                       # mlp tile
            const_spec((meta.Gp, meta.Ep)),          # gate_param
            const_spec((meta.Ep, meta.Hpk)),         # gate->lane selection
            const_spec((meta.Ep, meta.Op)),          # gate-weighted out bias
            const_spec((meta.Dp, meta.Hpk)), const_spec((1, meta.Hpk)),   # w1,b1
            const_spec((meta.Hpk, meta.Hpk)), const_spec((1, meta.Hpk)),  # w2,b2
            const_spec((meta.Hpk, meta.Hpk)), const_spec((1, meta.Hpk)),  # w3,b3
            const_spec((meta.Hpk, meta.Op)),                              # w4
        ],
        out_specs=act_spec(meta.Op),
        compiler_params=pltpu.CompilerParams(
            dimension_semantics=("parallel",),
            vmem_limit_bytes=32 * 1024 * 1024,
        ),
    )(hx_p, mx_p,
      packed["gate"], packed["sel"], packed["b4mat"],
      packed["w1"], packed["b1"], packed["w2"], packed["b2"],
      packed["w3"], packed["b3"], packed["w4"])

    out = out_p[:B, :meta.out_dim]
    return out.reshape(base_shape + (meta.out_dim,))


# --------------------------- pure-JAX reference ----------------------------- #
def mmoe_ref(hyper_x, mlp_x, params):
    base_shape = hyper_x.shape[:-1]
    hx = hyper_x.reshape(-1, hyper_x.shape[-1])
    mx = mlp_x.reshape(-1, mlp_x.shape[-1]).astype(jnp.float32)
    idx = jnp.argmax(hx != 0, axis=1)                    # one-hot selector
    gates = jax.nn.softmax(params["gate"][idx, :], axis=1)
    E = params["w1"].shape[0]
    out = 0.0
    for e in range(E):
        h = jax.nn.relu(mx @ params["w1"][e] + params["b1"][e])
        h = jax.nn.relu(h @ params["w2"][e] + params["b2"][e])
        h = jax.nn.relu(h @ params["w3"][e] + params["b3"][e])
        y = h @ params["w4"][e] + params["b4"][e]
        out = out + gates[:, e:e + 1] * y
    return out.reshape(base_shape + (-1,))


# --------------------------------- main ------------------------------------- #
if __name__ == "__main__":
    # small config consistent with the module defaults (shrunk hidden dim)
    MLP_IN, HYPER_IN, MLP_OUT, HIDDEN, N_EXPERT = 9, 10, 8, 32, 3
    BASE = (2, 4)                                        # leading batch shape

    key = jax.random.PRNGKey(0)
    keys = jax.random.split(key, 12)

    # deterministic synthetic parameters (the module inits gate_param to zeros;
    # we use random values so the gating path is actually exercised).
    params = {
        "gate": 0.5 * jax.random.normal(keys[0], (HYPER_IN, N_EXPERT), jnp.float32),
        "w1": 0.2 * jax.random.normal(keys[1], (N_EXPERT, MLP_IN, HIDDEN), jnp.float32),
        "b1": 0.1 * jax.random.normal(keys[2], (N_EXPERT, HIDDEN), jnp.float32),
        "w2": 0.2 * jax.random.normal(keys[3], (N_EXPERT, HIDDEN, HIDDEN), jnp.float32),
        "b2": 0.1 * jax.random.normal(keys[4], (N_EXPERT, HIDDEN), jnp.float32),
        "w3": 0.2 * jax.random.normal(keys[5], (N_EXPERT, HIDDEN, HIDDEN), jnp.float32),
        "b3": 0.1 * jax.random.normal(keys[6], (N_EXPERT, HIDDEN), jnp.float32),
        "w4": 0.2 * jax.random.normal(keys[7], (N_EXPERT, HIDDEN, MLP_OUT), jnp.float32),
        "b4": 0.1 * jax.random.normal(keys[8], (N_EXPERT, MLP_OUT), jnp.float32),
    }

    # one-time packing (outside the forward path)
    packed, meta = pack_mmoe_params(params)
    packed = jax.tree_util.tree_map(jax.block_until_ready, packed)

    # hyper_x: one-hot per row (the only case where torch's nonzero() gather
    # is shape-consistent); mlp_x: dense features.
    sel_idx = jax.random.randint(keys[9], BASE, 0, HYPER_IN)
    hyper_x = jax.nn.one_hot(sel_idx, HYPER_IN, dtype=jnp.float32)      # (2, 4, 10)
    mlp_x = jax.random.normal(keys[10], BASE + (MLP_IN,), jnp.float32)  # (2, 4, 9)

    out = jax.block_until_ready(mmoe_pallas(hyper_x, mlp_x, packed, meta))
    ref = jax.block_until_ready(mmoe_ref(hyper_x, mlp_x, params))

    assert out.shape == BASE + (MLP_OUT,), out.shape
    # kernel runs matmul inputs in bf16 (f32 accumulation); tolerance reflects that.
    assert jnp.allclose(out, ref, atol=5e-2, rtol=5e-2), \
        f"max err {jnp.max(jnp.abs(out - ref))}"
    print("KERNEL_OK")
</pallas_src>

<mosaic_0001>
module attributes {stable_mosaic.version = 11 : i64} {
  func.func @_mmoe_kernel(%arg0: i32, %arg1: memref<256x128xf32, #tpu.memory_space<vmem>>, %arg2: memref<256x128xbf16, #tpu.memory_space<vmem>>, %arg3: memref<128x128xf32, #tpu.memory_space<vmem>>, %arg4: memref<128x128xf32, #tpu.memory_space<vmem>>, %arg5: memref<128x128xf32, #tpu.memory_space<vmem>>, %arg6: memref<128x128xbf16, #tpu.memory_space<vmem>>, %arg7: memref<1x128xf32, #tpu.memory_space<vmem>>, %arg8: memref<128x128xbf16, #tpu.memory_space<vmem>>, %arg9: memref<1x128xf32, #tpu.memory_space<vmem>>, %arg10: memref<128x128xbf16, #tpu.memory_space<vmem>>, %arg11: memref<1x128xf32, #tpu.memory_space<vmem>>, %arg12: memref<128x128xbf16, #tpu.memory_space<vmem>>, %arg13: memref<256x128xf32, #tpu.memory_space<vmem>>) attributes {dimension_semantics = [#tpu.dimension_semantics<parallel>], iteration_bounds = array<i64: 1>, scalar_prefetch = 0 : i64, scratch_operands = 0 : i64, tpu.core_type = #tpu.core_type<tc>, window_params = [{transform_indices = @transform_0, window_bounds = array<i64: 256, 128>}, {transform_indices = @transform_1, window_bounds = array<i64: 256, 128>}, {pipeline_mode = #tpu.pipeline_mode<synchronous>, transform_indices = @transform_2, window_bounds = array<i64: 128, 128>}, {pipeline_mode = #tpu.pipeline_mode<synchronous>, transform_indices = @transform_3, window_bounds = array<i64: 128, 128>}, {pipeline_mode = #tpu.pipeline_mode<synchronous>, transform_indices = @transform_4, window_bounds = array<i64: 128, 128>}, {pipeline_mode = #tpu.pipeline_mode<synchronous>, transform_indices = @transform_5, window_bounds = array<i64: 128, 128>}, {pipeline_mode = #tpu.pipeline_mode<synchronous>, transform_indices = @transform_6, window_bounds = array<i64: 1, 128>}, {pipeline_mode = #tpu.pipeline_mode<synchronous>, transform_indices = @transform_7, window_bounds = array<i64: 128, 128>}, {pipeline_mode = #tpu.pipeline_mode<synchronous>, transform_indices = @transform_8, window_bounds = array<i64: 1, 128>}, {pipeline_mode = #tpu.pipeline_mode<synchronous>, transform_indices = @transform_9, window_bounds = array<i64: 128, 128>}, {pipeline_mode = #tpu.pipeline_mode<synchronous>, transform_indices = @transform_10, window_bounds = array<i64: 1, 128>}, {pipeline_mode = #tpu.pipeline_mode<synchronous>, transform_indices = @transform_11, window_bounds = array<i64: 128, 128>}, {transform_indices = @transform_12, window_bounds = array<i64: 256, 128>}]} {
    %c0 = arith.constant 0 : index
    %c0_0 = arith.constant 0 : index
    %0 = vector.load %arg1[%c0, %c0_0] : memref<256x128xf32, #tpu.memory_space<vmem>>, vector<256x128xf32>
    %cst = arith.constant 0.000000e+00 : f32
    %1 = vector.broadcast %cst : f32 to vector<256x128xf32>
    %2 = arith.cmpf one, %0, %1 : vector<256x128xf32>
    %3 = arith.extui %2 : vector<256x128xi1> to vector<256x128xi32>
    %4 = arith.sitofp %3 : vector<256x128xi32> to vector<256x128xf32>
    %c0_1 = arith.constant 0 : index
    %c0_2 = arith.constant 0 : index
    %5 = vector.load %arg3[%c0_1, %c0_2] : memref<128x128xf32, #tpu.memory_space<vmem>>, vector<128x128xf32>
    %cst_3 = arith.constant dense<0.000000e+00> : vector<256x128xf32>
    %6 = tpu.matmul %4, %5, %cst_3 {dimension_numbers = #tpu.dot_dimension_numbers<[1], [0], [0], [1], [0, 0, 1, 1], [], []>} : vector<256x128xf32>, vector<128x128xf32>, vector<256x128xf32> -> vector<256x128xf32>
    %7 = tpu.iota {dimensions = array<i32: 1>} : vector<256x128xi32>
    %c3_i32 = arith.constant 3 : i32
    %8 = vector.broadcast %c3_i32 : i32 to vector<256x128xi32>
    %9 = arith.cmpi slt, %7, %8 : vector<256x128xi32>
    %cst_4 = arith.constant 0xFF800000 : f32
    %10 = vector.broadcast %cst_4 : f32 to vector<256x128xf32>
    %11 = arith.select %9, %6, %10 : vector<256x128xi1>, vector<256x128xf32>
    %cst_5 = arith.constant dense<0xFF800000> : vector<256xf32>
    %12 = vector.multi_reduction <maximumf>, %11, %cst_5 [1] : vector<256x128xf32> to vector<256xf32>
    %13 = vector.shape_cast %12 : vector<256xf32> to vector<256x1xf32>
    %14 = vector.broadcast %13 : vector<256x1xf32> to vector<256x128xf32>
    %15 = arith.subf %6, %14 : vector<256x128xf32>
    %16 = math.exp %15 : vector<256x128xf32>
    %cst_6 = arith.constant 0.000000e+00 : f32
    %17 = vector.broadcast %cst_6 : f32 to vector<256x128xf32>
    %18 = arith.select %9, %16, %17 : vector<256x128xi1>, vector<256x128xf32>
    %cst_7 = arith.constant dense<0.000000e+00> : vector<256xf32>
    %19 = vector.multi_reduction <add>, %18, %cst_7 [1] : vector<256x128xf32> to vector<256xf32>
    %20 = vector.shape_cast %19 : vector<256xf32> to vector<256x1xf32>
    %21 = vector.broadcast %20 : vector<256x1xf32> to vector<256x128xf32>
    %22 = arith.divf %18, %21 : vector<256x128xf32>
    %c0_8 = arith.constant 0 : index
    %c0_9 = arith.constant 0 : index
    %23 = vector.load %arg4[%c0_8, %c0_9] : memref<128x128xf32, #tpu.memory_space<vmem>>, vector<128x128xf32>
    %cst_10 = arith.constant dense<0.000000e+00> : vector<256x128xf32>
    %24 = tpu.matmul %22, %23, %cst_10 {dimension_numbers = #tpu.dot_dimension_numbers<[1], [0], [0], [1], [0, 0, 1, 1], [], []>} : vector<256x128xf32>, vector<128x128xf32>, vector<256x128xf32> -> vector<256x128xf32>
    %c0_11 = arith.constant 0 : index
    %c0_12 = arith.constant 0 : index
    %25 = vector.load %arg5[%c0_11, %c0_12] : memref<128x128xf32, #tpu.memory_space<vmem>>, vector<128x128xf32>
    %cst_13 = arith.constant dense<0.000000e+00> : vector<256x128xf32>
    %26 = tpu.matmul %22, %25, %cst_13 {dimension_numbers = #tpu.dot_dimension_numbers<[1], [0], [0], [1], [0, 0, 1, 1], [], []>} : vector<256x128xf32>, vector<128x128xf32>, vector<256x128xf32> -> vector<256x128xf32>
    %c0_14 = arith.constant 0 : index
    %c0_15 = arith.constant 0 : index
    %27 = vector.load %arg2[%c0_14, %c0_15] : memref<256x128xbf16, #tpu.memory_space<vmem>>, vector<256x128xbf16>
    %c0_16 = arith.constant 0 : index
    %c0_17 = arith.constant 0 : index
    %28 = vector.load %arg6[%c0_16, %c0_17] : memref<128x128xbf16, #tpu.memory_space<vmem>>, vector<128x128xbf16>
    %cst_18 = arith.constant dense<0.000000e+00> : vector<256x128xf32>
    %29 = tpu.matmul %27, %28, %cst_18 {dimension_numbers = #tpu.dot_dimension_numbers<[1], [0], [0], [1], [0, 0, 1, 1], [], []>} : vector<256x128xbf16>, vector<128x128xbf16>, vector<256x128xf32> -> vector<256x128xf32>
    %c0_19 = arith.constant 0 : index
    %c0_20 = arith.constant 0 : index
    %30 = vector.load %arg7[%c0_19, %c0_20] : memref<1x128xf32, #tpu.memory_space<vmem>>, vector<1x128xf32>
    %31 = vector.broadcast %30 : vector<1x128xf32> to vector<256x128xf32>
    %32 = arith.addf %29, %31 : vector<256x128xf32>
    %cst_21 = arith.constant 0.000000e+00 : f32
    %33 = vector.broadcast %cst_21 : f32 to vector<256x128xf32>
    %34 = arith.maximumf %32, %33 : vector<256x128xf32>
    %35 = arith.truncf %34 : vector<256x128xf32> to vector<256x128xbf16>
    %c0_22 = arith.constant 0 : index
    %c0_23 = arith.constant 0 : index
    %36 = vector.load %arg8[%c0_22, %c0_23] : memref<128x128xbf16, #tpu.memory_space<vmem>>, vector<128x128xbf16>
    %cst_24 = arith.constant dense<0.000000e+00> : vector<256x128xf32>
    %37 = tpu.matmul %35, %36, %cst_24 {dimension_numbers = #tpu.dot_dimension_numbers<[1], [0], [0], [1], [0, 0, 1, 1], [], []>} : vector<256x128xbf16>, vector<128x128xbf16>, vector<256x128xf32> -> vector<256x128xf32>
    %c0_25 = arith.constant 0 : index
    %c0_26 = arith.constant 0 : index
    %38 = vector.load %arg9[%c0_25, %c0_26] : memref<1x128xf32, #tpu.memory_space<vmem>>, vector<1x128xf32>
    %39 = vector.broadcast %38 : vector<1x128xf32> to vector<256x128xf32>
    %40 = arith.addf %37, %39 : vector<256x128xf32>
    %cst_27 = arith.constant 0.000000e+00 : f32
    %41 = vector.broadcast %cst_27 : f32 to vector<256x128xf32>
    %42 = arith.maximumf %40, %41 : vector<256x128xf32>
    %43 = arith.truncf %42 : vector<256x128xf32> to vector<256x128xbf16>
    %c0_28 = arith.constant 0 : index
    %c0_29 = arith.constant 0 : index
    %44 = vector.load %arg10[%c0_28, %c0_29] : memref<128x128xbf16, #tpu.memory_space<vmem>>, vector<128x128xbf16>
    %cst_30 = arith.constant dense<0.000000e+00> : vector<256x128xf32>
    %45 = tpu.matmul %43, %44, %cst_30 {dimension_numbers = #tpu.dot_dimension_numbers<[1], [0], [0], [1], [0, 0, 1, 1], [], []>} : vector<256x128xbf16>, vector<128x128xbf16>, vector<256x128xf32> -> vector<256x128xf32>
    %c0_31 = arith.constant 0 : index
    %c0_32 = arith.constant 0 : index
    %46 = vector.load %arg11[%c0_31, %c0_32] : memref<1x128xf32, #tpu.memory_space<vmem>>, vector<1x128xf32>
    %47 = vector.broadcast %46 : vector<1x128xf32> to vector<256x128xf32>
    %48 = arith.addf %45, %47 : vector<256x128xf32>
    %cst_33 = arith.constant 0.000000e+00 : f32
    %49 = vector.broadcast %cst_33 : f32 to vector<256x128xf32>
    %50 = arith.maximumf %48, %49 : vector<256x128xf32>
    %51 = arith.mulf %50, %24 : vector<256x128xf32>
    %52 = arith.truncf %51 : vector<256x128xf32> to vector<256x128xbf16>
    %c0_34 = arith.constant 0 : index
    %c0_35 = arith.constant 0 : index
    %53 = vector.load %arg12[%c0_34, %c0_35] : memref<128x128xbf16, #tpu.memory_space<vmem>>, vector<128x128xbf16>
    %cst_36 = arith.constant dense<0.000000e+00> : vector<256x128xf32>
    %54 = tpu.matmul %52, %53, %cst_36 {dimension_numbers = #tpu.dot_dimension_numbers<[1], [0], [0], [1], [0, 0, 1, 1], [], []>} : vector<256x128xbf16>, vector<128x128xbf16>, vector<256x128xf32> -> vector<256x128xf32>
    %55 = arith.addf %54, %26 : vector<256x128xf32>
    %c0_37 = arith.constant 0 : index
    %c0_38 = arith.constant 0 : index
    %56 = vector.load %arg13[%c0_37, %c0_38] : memref<256x128xf32, #tpu.memory_space<vmem>>, vector<256x128xf32>
    tpu.vector_store %arg13[%c0_37, %c0_38], %55 {strides = array<i32>} : memref<256x128xf32, #tpu.memory_space<vmem>>, vector<256x128xf32>,
    return
  }
  func.func @transform_0(%arg0: i32) -> (i32, i32) {
    %c0_i32 = arith.constant 0 : i32
    %c0_i32_0 = arith.constant 0 : i32
    return %arg0, %c0_i32 : i32, i32
  }
  func.func @transform_1(%arg0: i32) -> (i32, i32) {
    %c0_i32 = arith.constant 0 : i32
    %c0_i32_0 = arith.constant 0 : i32
    return %arg0, %c0_i32 : i32, i32
  }
  func.func @transform_2(%arg0: i32) -> (i32, i32) {
    %c0_i32 = arith.constant 0 : i32
    %c0_i32_0 = arith.constant 0 : i32
    %c0_i32_1 = arith.constant 0 : i32
    return %c0_i32, %c0_i32_0 : i32, i32
  }
  func.func @transform_3(%arg0: i32) -> (i32, i32) {
    %c0_i32 = arith.constant 0 : i32
    %c0_i32_0 = arith.constant 0 : i32
    %c0_i32_1 = arith.constant 0 : i32
    return %c0_i32, %c0_i32_0 : i32, i32
  }
  func.func @transform_4(%arg0: i32) -> (i32, i32) {
    %c0_i32 = arith.constant 0 : i32
    %c0_i32_0 = arith.constant 0 : i32
    %c0_i32_1 = arith.constant 0 : i32
    return %c0_i32, %c0_i32_0 : i32, i32
  }
  func.func @transform_5(%arg0: i32) -> (i32, i32) {
    %c0_i32 = arith.constant 0 : i32
    %c0_i32_0 = arith.constant 0 : i32
    %c0_i32_1 = arith.constant 0 : i32
    return %c0_i32, %c0_i32_0 : i32, i32
  }
  func.func @transform_6(%arg0: i32) -> (i32, i32) {
    %c0_i32 = arith.constant 0 : i32
    %c0_i32_0 = arith.constant 0 : i32
    %c0_i32_1 = arith.constant 0 : i32
    return %c0_i32, %c0_i32_0 : i32, i32
  }
  func.func @transform_7(%arg0: i32) -> (i32, i32) {
    %c0_i32 = arith.constant 0 : i32
    %c0_i32_0 = arith.constant 0 : i32
    %c0_i32_1 = arith.constant 0 : i32
    return %c0_i32, %c0_i32_0 : i32, i32
  }
  func.func @transform_8(%arg0: i32) -> (i32, i32) {
    %c0_i32 = arith.constant 0 : i32
    %c0_i32_0 = arith.constant 0 : i32
    %c0_i32_1 = arith.constant 0 : i32
    return %c0_i32, %c0_i32_0 : i32, i32
  }
  func.func @transform_9(%arg0: i32) -> (i32, i32) {
    %c0_i32 = arith.constant 0 : i32
    %c0_i32_0 = arith.constant 0 : i32
    %c0_i32_1 = arith.constant 0 : i32
    return %c0_i32, %c0_i32_0 : i32, i32
  }
  func.func @transform_10(%arg0: i32) -> (i32, i32) {
    %c0_i32 = arith.constant 0 : i32
    %c0_i32_0 = arith.constant 0 : i32
    %c0_i32_1 = arith.constant 0 : i32
    return %c0_i32, %c0_i32_0 : i32, i32
  }
  func.func @transform_11(%arg0: i32) -> (i32, i32) {
    %c0_i32 = arith.constant 0 : i32
    %c0_i32_0 = arith.constant 0 : i32
    %c0_i32_1 = arith.constant 0 : i32
    return %c0_i32, %c0_i32_0 : i32, i32
  }
  func.func @transform_12(%arg0: i32) -> (i32, i32) {
    %c0_i32 = arith.constant 0 : i32
    %c0_i32_0 = arith.constant 0 : i32
    return %arg0, %c0_i32 : i32, i32
  }
}

</mosaic_0001>

<llo_original>
// kernel: mmoe_pallas.1
$region0: #{mmoe_pallas.1}
  #allocation0 [shape = 'u32[]', space=smem, size = 0x4, offset = 0x4, fixed_abs, tag = 'smem constant byte address 0x4 - core index']
  #allocation1 [shape = 'u32[144,128]{1,0:T(1,128)}', space=vmem, size = 0x12000, scoped, tag = 'internal scratch']
  %s0 = inlined_call_operand.vmem [shape: f32[256,128], index: 0, kind: input, shape index: {}]
  %s1 = inlined_call_operand.vmem [shape: bf16[256,128], index: 1, kind: input, shape index: {}]
  %s2 = inlined_call_operand.vmem [shape: f32[128,128], index: 2, kind: input, shape index: {}]
  %s3 = inlined_call_operand.vmem [shape: f32[128,128], index: 3, kind: input, shape index: {}]
  %s4 = inlined_call_operand.vmem [shape: f32[128,128], index: 4, kind: input, shape index: {}]
  %s5 = inlined_call_operand.hbm [shape: bf16[128,128], index: 5, kind: input, shape index: {}]
  %s6 = inlined_call_operand.vmem [shape: f32[1,128], index: 6, kind: input, shape index: {}]
  %s7 = inlined_call_operand.vmem [shape: bf16[128,128], index: 7, kind: input, shape index: {}]
  %s8 = inlined_call_operand.vmem [shape: f32[1,128], index: 8, kind: input, shape index: {}]
  %s9 = inlined_call_operand.hbm [shape: bf16[128,128], index: 9, kind: input, shape index: {}]
  %s10 = inlined_call_operand.vmem [shape: f32[1,128], index: 10, kind: input, shape index: {}]
  %s11 = inlined_call_operand.hbm [shape: bf16[128,128], index: 11, kind: input, shape index: {}]
  %s12 = inlined_call_operand.vmem [shape: f32[256,128], index: 12, kind: output, shape index: {}]
  %s13 = sld [smem:[#allocation0]]
  $region70: #{mmoe_pallas.1} parent=0
    _
  %s15 = ssub.s32 1, %s13
  %s16 = scalar_select 0, %s15, %s13
  $region1: #{mmoe_pallas.1} parent=0
    #allocation2 [shape = 'u8[32768]{0}', space=vmem, size = 0x8000, scoped, tag = 'input window, operand 5, single buffered']
    #allocation3 [shape = 's32[1]{0}', space=sflag, size = 0x4, scoped, tag = 'scoped memory for mmoe_pallas.1']
    #allocation4 [shape = 'u8[32768]{0}', space=vmem, size = 0x8000, scoped, tag = 'input window, operand 9, single buffered']
    #allocation5 [shape = 's32[1]{0}', space=sflag, size = 0x4, scoped, tag = 'scoped memory for mmoe_pallas.1']
    #allocation6 [shape = 'u8[32768]{0}', space=vmem, size = 0x8000, scoped, tag = 'input window, operand 11, single buffered']
    %17 = vsyncpa [#allocation3], 0
    %18 = vsyncpa [#allocation5], 0
    // Predicated region
    $region2: #{mmoe_pallas.1} parent=1 // pred_check
      _
    $region3: #{mmoe_pallas.1} parent=1 // pred_check_branch
      %20 = sbr.rel (0) target = $region5
    $region4: #{mmoe_pallas.1} parent=1 // pred_region
      _
    $region5: #{mmoe_pallas.1} parent=1 // pred_fallthru
      _
    // Predicated region
    $region6: #{mmoe_pallas.1} parent=1 // pred_check
      _
    $region7: #{mmoe_pallas.1} parent=1 // pred_check_branch
      %22 = sbr.rel (0) target = $region9
    $region8: #{mmoe_pallas.1} parent=1 // pred_region
      _
    $region9: #{mmoe_pallas.1} parent=1 // pred_fallthru
      _
    // Predicated region
    $region10: #{mmoe_pallas.1} parent=1 // pred_check
      _
    $region11: #{mmoe_pallas.1} parent=1 // pred_check_branch
      %24 = sbr.rel (0) target = $region13
    $region12: #{mmoe_pallas.1} parent=1 // pred_region
      _
    $region13: #{mmoe_pallas.1} parent=1 // pred_fallthru
      _
    // Predicated region
    $region14: #{mmoe_pallas.1} parent=1 // pred_check
      _
    $region15: #{mmoe_pallas.1} parent=1 // pred_check_branch
      %26 = sbr.rel (0) target = $region17
    $region16: #{mmoe_pallas.1} parent=1 // pred_region
      _
    $region17: #{mmoe_pallas.1} parent=1 // pred_fallthru
      _
    // Predicated region
    $region18: #{mmoe_pallas.1} parent=1 // pred_check
      _
    $region19: #{mmoe_pallas.1} parent=1 // pred_check_branch
      %28 = sbr.rel (0) target = $region21
    $region20: #{mmoe_pallas.1} parent=1 // pred_region
      _
    $region21: #{mmoe_pallas.1} parent=1 // pred_fallthru
      _
    // Predicated region
    $region22: #{mmoe_pallas.1} parent=1 // pred_check
      _
    $region23: #{mmoe_pallas.1} parent=1 // pred_check_branch
      %30 = sbr.rel (0) target = $region25
    $region24: #{mmoe_pallas.1} parent=1 // pred_region
      %s32 = ssub.s32 1024, 1024
      %33 = vsyncadd [#allocation3], %s32
      %s34 = sshll.u32 [#allocation2], 4
      %s35 = int_to_ptr.vmem [resolvable:$true] %s34
      %40 = dma.hbm_to_vmem [thread:$0]  %s5, 1024, %s35, [#allocation3], 64, 64, 4
    $region25: #{mmoe_pallas.1} parent=1 // pred_fallthru
      _
    // Predicated region
    $region26: #{mmoe_pallas.1} parent=1 // pred_check
      _
    $region27: #{mmoe_pallas.1} parent=1 // pred_check_branch
      %42 = sbr.rel (0) target = $region29
    $region28: #{mmoe_pallas.1} parent=1 // pred_region
      _
    $region29: #{mmoe_pallas.1} parent=1 // pred_fallthru
      _
    // Predicated region
    $region30: #{mmoe_pallas.1} parent=1 // pred_check
      _
    $region31: #{mmoe_pallas.1} parent=1 // pred_check_branch
      %44 = sbr.rel (0) target = $region33
    $region32: #{mmoe_pallas.1} parent=1 // pred_region
      _
    $region33: #{mmoe_pallas.1} parent=1 // pred_fallthru
      _
    // Predicated region
    $region34: #{mmoe_pallas.1} parent=1 // pred_check
      _
    $region35: #{mmoe_pallas.1} parent=1 // pred_check_branch
      %46 = sbr.rel (0) target = $region37
    $region36: #{mmoe_pallas.1} parent=1 // pred_region
      _
    $region37: #{mmoe_pallas.1} parent=1 // pred_fallthru
      _
    // Predicated region
    $region38: #{mmoe_pallas.1} parent=1 // pred_check
      _
    $region39: #{mmoe_pallas.1} parent=1 // pred_check_branch
      %48 = sbr.rel (0) target = $region41
    $region40: #{mmoe_pallas.1} parent=1 // pred_region
      %s50 = ssub.s32 1024, 1024
      %51 = vsyncadd [#allocation5], %s50
      %s52 = sshll.u32 [#allocation4], 4
      %s53 = int_to_ptr.vmem [resolvable:$true] %s52
      %58 = dma.hbm_to_vmem [thread:$0]  %s9, 1024, %s53, [#allocation5], 64, 64, 4
    $region41: #{mmoe_pallas.1} parent=1 // pred_fallthru
      _
    // Predicated region
    $region42: #{mmoe_pallas.1} parent=1 // pred_check
      _
    $region43: #{mmoe_pallas.1} parent=1 // pred_check_branch
      %60 = sbr.rel (0) target = $region45
    $region44: #{mmoe_pallas.1} parent=1 // pred_region
      _
    $region45: #{mmoe_pallas.1} parent=1 // pred_fallthru
      _
    // Predicated region
    $region46: #{mmoe_pallas.1} parent=1 // pred_check
      _
    $region47: #{mmoe_pallas.1} parent=1 // pred_check_branch
      %62 = sbr.rel (0) target = $region49
    $region48: #{mmoe_pallas.1} parent=1 // pred_region
      %s64 = ssub.s32 1024, 1024
      %65 = vsyncadd [#allocation5], %s64
      %s66 = sshll.u32 [#allocation6], 4
      %s67 = int_to_ptr.vmem [resolvable:$true] %s66
      %72 = dma.hbm_to_vmem [thread:$0]  %s11, 1024, %s67, [#allocation5], 64, 64, 4
    $region49: #{mmoe_pallas.1} parent=1 // pred_fallthru
      _
    // Predicated region
    $region50: #{mmoe_pallas.1} parent=1 // pred_check
      _
    $region51: #{mmoe_pallas.1} parent=1 // pred_check_branch
      %74 = sbr.rel (0) target = $region53
    $region52: #{mmoe_pallas.1} parent=1 // pred_region
      %75 = dma.done [#allocation3], 1024
    $region53: #{mmoe_pallas.1} parent=1 // pred_fallthru
      _
    // Predicated region
    $region54: #{mmoe_pallas.1} parent=1 // pred_check
      _
    $region55: #{mmoe_pallas.1} parent=1 // pred_check_branch
      %77 = sbr.rel (0) target = $region57
    $region56: #{mmoe_pallas.1} parent=1 // pred_region
      %78 = dma.done [#allocation5], 1024
    $region57: #{mmoe_pallas.1} parent=1 // pred_fallthru
      _
    // Predicated region
    $region58: #{mmoe_pallas.1} parent=1 // pred_check
      _
    $region59: #{mmoe_pallas.1} parent=1 // pred_check_branch
      %80 = sbr.rel (0) target = $region61
    $region60: #{mmoe_pallas.1} parent=1 // pred_region
      %81 = dma.done [#allocation5], 1024
    $region61: #{mmoe_pallas.1} parent=1 // pred_fallthru
      _
    %v83 = vld [vmem:[%s0] sm:$0xff]
    %v84 = vld [vmem:[%s0 + $0x8] sm:$0xff]
    %v85 = vld [vmem:[%s0 + $0x10] sm:$0xff]
    %v86 = vld [vmem:[%s0 + $0x18] sm:$0xff]
    %v87 = vld [vmem:[%s0 + $0x20] sm:$0xff]
    %v88 = vld [vmem:[%s0 + $0x28] sm:$0xff]
    %v89 = vld [vmem:[%s0 + $0x30] sm:$0xff]
    %v90 = vld [vmem:[%s0 + $0x38] sm:$0xff]
    %v91 = vld [vmem:[%s0 + $0x40] sm:$0xff]
    %v92 = vld [vmem:[%s0 + $0x48] sm:$0xff]
    %v93 = vld [vmem:[%s0 + $0x50] sm:$0xff]
    %v94 = vld [vmem:[%s0 + $0x58] sm:$0xff]
    %v95 = vld [vmem:[%s0 + $0x60] sm:$0xff]
    %v96 = vld [vmem:[%s0 + $0x68] sm:$0xff]
    %v97 = vld [vmem:[%s0 + $0x70] sm:$0xff]
    %v98 = vld [vmem:[%s0 + $0x78] sm:$0xff]
    %v99 = vld [vmem:[%s0 + $0x80] sm:$0xff]
    %v100 = vld [vmem:[%s0 + $0x88] sm:$0xff]
    %v101 = vld [vmem:[%s0 + $0x90] sm:$0xff]
    %v102 = vld [vmem:[%s0 + $0x98] sm:$0xff]
    %v103 = vld [vmem:[%s0 + $0xa0] sm:$0xff]
    %v104 = vld [vmem:[%s0 + $0xa8] sm:$0xff]
    %v105 = vld [vmem:[%s0 + $0xb0] sm:$0xff]
    %v106 = vld [vmem:[%s0 + $0xb8] sm:$0xff]
    %v107 = vld [vmem:[%s0 + $0xc0] sm:$0xff]
    %v108 = vld [vmem:[%s0 + $0xc8] sm:$0xff]
    %v109 = vld [vmem:[%s0 + $0xd0] sm:$0xff]
    %v110 = vld [vmem:[%s0 + $0xd8] sm:$0xff]
    %v111 = vld [vmem:[%s0 + $0xe0] sm:$0xff]
    %v112 = vld [vmem:[%s0 + $0xe8] sm:$0xff]
    %v113 = vld [vmem:[%s0 + $0xf0] sm:$0xff]
    %v114 = vld [vmem:[%s0 + $0xf8] sm:$0xff]
    %vm115 = vcmp.ne.f32.partialorder %v83, 0.0
    %vm116 = vcmp.ne.f32.partialorder %v84, 0.0
    %vm117 = vcmp.ne.f32.partialorder %v85, 0.0
    %vm118 = vcmp.ne.f32.partialorder %v86, 0.0
    %vm119 = vcmp.ne.f32.partialorder %v87, 0.0
    %vm120 = vcmp.ne.f32.partialorder %v88, 0.0
    %vm121 = vcmp.ne.f32.partialorder %v89, 0.0
    %vm122 = vcmp.ne.f32.partialorder %v90, 0.0
    %vm123 = vcmp.ne.f32.partialorder %v91, 0.0
    %vm124 = vcmp.ne.f32.partialorder %v92, 0.0
    %vm125 = vcmp.ne.f32.partialorder %v93, 0.0
    %vm126 = vcmp.ne.f32.partialorder %v94, 0.0
    %vm127 = vcmp.ne.f32.partialorder %v95, 0.0
    %vm128 = vcmp.ne.f32.partialorder %v96, 0.0
    %vm129 = vcmp.ne.f32.partialorder %v97, 0.0
    %vm130 = vcmp.ne.f32.partialorder %v98, 0.0
    %vm131 = vcmp.ne.f32.partialorder %v99, 0.0
    %vm132 = vcmp.ne.f32.partialorder %v100, 0.0
    %vm133 = vcmp.ne.f32.partialorder %v101, 0.0
    %vm134 = vcmp.ne.f32.partialorder %v102, 0.0
    %vm135 = vcmp.ne.f32.partialorder %v103, 0.0
    %vm136 = vcmp.ne.f32.partialorder %v104, 0.0
    %vm137 = vcmp.ne.f32.partialorder %v105, 0.0
    %vm138 = vcmp.ne.f32.partialorder %v106, 0.0
    %vm139 = vcmp.ne.f32.partialorder %v107, 0.0
    %vm140 = vcmp.ne.f32.partialorder %v108, 0.0
    %vm141 = vcmp.ne.f32.partialorder %v109, 0.0
    %vm142 = vcmp.ne.f32.partialorder %v110, 0.0
    %vm143 = vcmp.ne.f32.partialorder %v111, 0.0
    %vm144 = vcmp.ne.f32.partialorder %v112, 0.0
    %vm145 = vcmp.ne.f32.partialorder %v113, 0.0
    %vm146 = vcmp.ne.f32.partialorder %v114, 0.0
    %v147 = vsel %vm115, 1, 0
    %v148 = vsel %vm116, 1, 0
    %v149 = vsel %vm117, 1, 0
    %v150 = vsel %vm118, 1, 0
    %v151 = vsel %vm119, 1, 0
    %v152 = vsel %vm120, 1, 0
    %v153 = vsel %vm121, 1, 0
    %v154 = vsel %vm122, 1, 0
    %v155 = vsel %vm123, 1, 0
    %v156 = vsel %vm124, 1, 0
    %v157 = vsel %vm125, 1, 0
    %v158 = vsel %vm126, 1, 0
    %v159 = vsel %vm127, 1, 0
    %v160 = vsel %vm128, 1, 0
    %v161 = vsel %vm129, 1, 0
    %v162 = vsel %vm130, 1, 0
    %v163 = vsel %vm131, 1, 0
    %v164 = vsel %vm132, 1, 0
    %v165 = vsel %vm133, 1, 0
    %v166 = vsel %vm134, 1, 0
    %v167 = vsel %vm135, 1, 0
    %v168 = vsel %vm136, 1, 0
    %v169 = vsel %vm137, 1, 0
    %v170 = vsel %vm138, 1, 0
    %v171 = vsel %vm139, 1, 0
    %v172 = vsel %vm140, 1, 0
    %v173 = vsel %vm141, 1, 0
    %v174 = vsel %vm142, 1, 0
    %v175 = vsel %vm143, 1, 0
    %v176 = vsel %vm144, 1, 0
    %v177 = vsel %vm145, 1, 0
    %v178 = vsel %vm146, 1, 0
    %v179 = vcvt.s32.f32 %v147
    %v180 = vcvt.s32.f32 %v148
    %v181 = vcvt.s32.f32 %v149
    %v182 = vcvt.s32.f32 %v150
    %v183 = vcvt.s32.f32 %v151
    %v184 = vcvt.s32.f32 %v152
    %v185 = vcvt.s32.f32 %v153
    %v186 = vcvt.s32.f32 %v154
    %v187 = vcvt.s32.f32 %v155
    %v188 = vcvt.s32.f32 %v156
    %v189 = vcvt.s32.f32 %v157
    %v190 = vcvt.s32.f32 %v158
    %v191 = vcvt.s32.f32 %v159
    %v192 = vcvt.s32.f32 %v160
    %v193 = vcvt.s32.f32 %v161
    %v194 = vcvt.s32.f32 %v162
    %v195 = vcvt.s32.f32 %v163
    %v196 = vcvt.s32.f32 %v164
    %v197 = vcvt.s32.f32 %v165
    %v198 = vcvt.s32.f32 %v166
    %v199 = vcvt.s32.f32 %v167
    %v200 = vcvt.s32.f32 %v168
    %v201 = vcvt.s32.f32 %v169
    %v202 = vcvt.s32.f32 %v170
    %v203 = vcvt.s32.f32 %v171
    %v204 = vcvt.s32.f32 %v172
    %v205 = vcvt.s32.f32 %v173
    %v206 = vcvt.s32.f32 %v174
    %v207 = vcvt.s32.f32 %v175
    %v208 = vcvt.s32.f32 %v176
    %v209 = vcvt.s32.f32 %v177
    %v210 = vcvt.s32.f32 %v178
    %v211 = vld [vmem:[%s2] sm:$0xff]
    %v212 = vld [vmem:[%s2 + $0x8] sm:$0xff]
    %v213 = vld [vmem:[%s2 + $0x10] sm:$0xff]
    %v214 = vld [vmem:[%s2 + $0x18] sm:$0xff]
    %v215 = vld [vmem:[%s2 + $0x20] sm:$0xff]
    %v216 = vld [vmem:[%s2 + $0x28] sm:$0xff]
    %v217 = vld [vmem:[%s2 + $0x30] sm:$0xff]
    %v218 = vld [vmem:[%s2 + $0x38] sm:$0xff]
    %v219 = vld [vmem:[%s2 + $0x40] sm:$0xff]
    %v220 = vld [vmem:[%s2 + $0x48] sm:$0xff]
    %v221 = vld [vmem:[%s2 + $0x50] sm:$0xff]
    %v222 = vld [vmem:[%s2 + $0x58] sm:$0xff]
    %v223 = vld [vmem:[%s2 + $0x60] sm:$0xff]
    %v224 = vld [vmem:[%s2 + $0x68] sm:$0xff]
    %v225 = vld [vmem:[%s2 + $0x70] sm:$0xff]
    %v226 = vld [vmem:[%s2 + $0x78] sm:$0xff]
    %227 = vmatprep.subr.mxu0 0.0
    %228 = vmatpush1.msra.mxu0 %v211
    %229 = vmatprep.subr.mxu0 0.0
    %230 = vmatpush1.msra.mxu0 %v212
    %231 = vmatprep.subr.mxu0 0.0
    %232 = vmatpush1.msra.mxu0 %v213
    %233 = vmatprep.subr.mxu0 0.0
    %234 = vmatpush1.msra.mxu0 %v214
    %235 = vmatprep.subr.mxu0 0.0
    %236 = vmatpush1.msra.mxu0 %v215
    %237 = vmatprep.subr.mxu0 0.0
    %238 = vmatpush1.msra.mxu0 %v216
    %239 = vmatprep.subr.mxu0 0.0
    %240 = vmatpush1.msra.mxu0 %v217
    %241 = vmatprep.subr.mxu0 0.0
    %242 = vmatpush1.msra.mxu0 %v218
    %243 = vmatprep.subr.mxu0 0.0
    %244 = vmatpush1.msra.mxu0 %v219
    %245 = vmatprep.subr.mxu0 0.0
    %246 = vmatpush1.msra.mxu0 %v220
    %247 = vmatprep.subr.mxu0 0.0
    %248 = vmatpush1.msra.mxu0 %v221
    %249 = vmatprep.subr.mxu0 0.0
    %250 = vmatpush1.msra.mxu0 %v222
    %251 = vmatprep.subr.mxu0 0.0
    %252 = vmatpush1.msra.mxu0 %v223
    %253 = vmatprep.subr.mxu0 0.0
    %254 = vmatpush1.msra.mxu0 %v224
    %255 = vmatprep.subr.mxu0 0.0
    %256 = vmatpush1.msra.mxu0 %v225
    %257 = vmatprep.subr.mxu0 0.0
    %258 = vmatpush1.msra.mxu0 %v226
    %259 = vmatprep.subr.mxu0 0.0
    %260 = vmatpush1.msra.mxu0 0.0
    %261 = vmatprep.subr.mxu0 0.0
    %262 = vmatpush1.msra.mxu0 0.0
    %263 = vmatprep.subr.mxu0 0.0
    %264 = vmatpush1.msra.mxu0 0.0
    %265 = vmatprep.subr.mxu0 0.0
    %266 = vmatpush1.msra.mxu0 0.0
    %267 = vmatprep.subr.mxu0 0.0
    %268 = vmatpush1.msra.mxu0 0.0
    %269 = vmatprep.subr.mxu0 0.0
    %270 = vmatpush1.msra.mxu0 0.0
    %271 = vmatprep.subr.mxu0 0.0
    %272 = vmatpush1.msra.mxu0 0.0
    %273 = vmatprep.subr.mxu0 0.0
    %274 = vmatpush1.msra.mxu0 0.0
    %275 = vmatprep.subr.mxu0 0.0
    %276 = vmatpush1.msra.mxu0 0.0
    %277 = vmatprep.subr.mxu0 0.0
    %278 = vmatpush1.msra.mxu0 0.0
    %279 = vmatprep.subr.mxu0 0.0
    %280 = vmatpush1.msra.mxu0 0.0
    %281 = vmatprep.subr.mxu0 0.0
    %282 = vmatpush1.msra.mxu0 0.0
    %283 = vmatprep.subr.mxu0 0.0
    %284 = vmatpush1.msra.mxu0 0.0
    %285 = vmatprep.subr.mxu0 0.0
    %286 = vmatpush1.msra.mxu0 0.0
    %287 = vmatprep.subr.mxu0 0.0
    %288 = vmatpush1.msra.mxu0 0.0
    %289 = vmatprep.subr.mxu0 0.0
    %290 = vmatpush1.msra.mxu0 0.0
    %291 = vmatprep.mubr.f32.mxu0 0.0
    %292 = vmatmul.mubr.f32.gmra.mrb[0].mxu0 %v179
    %v293 = vpop.f32.mrb[0].mxu0
    %v294 = vadd.f32 0.0, %v293
    %v295 = vpop.f32.mrb[0].mxu0
    %296 = vmatprep.mubr.f32.mxu0 0.0
    %297 = vmatmul.mubr.f32.gmra.mrb[0].mxu0 %v180
    %v298 = vpop.f32.mrb[0].mxu0
    %v299 = vadd.f32 0.0, %v298
    %v300 = vpop.f32.mrb[0].mxu0
    %301 = vmatprep.mubr.f32.mxu0 0.0
    %302 = vmatmul.mubr.f32.gmra.mrb[0].mxu0 %v181
    %v303 = vpop.f32.mrb[0].mxu0
    %v304 = vadd.f32 0.0, %v303
    %v305 = vpop.f32.mrb[0].mxu0
    %306 = vmatprep.mubr.f32.mxu0 0.0
    %307 = vmatmul.mubr.f32.gmra.mrb[0].mxu0 %v182
    %v308 = vpop.f32.mrb[0].mxu0
    %v309 = vadd.f32 0.0, %v308
    %v310 = vpop.f32.mrb[0].mxu0
    %311 = vmatprep.mubr.f32.mxu0 0.0
    %312 = vmatmul.mubr.f32.gmra.mrb[0].mxu0 %v183
    %v313 = vpop.f32.mrb[0].mxu0
    %v314 = vadd.f32 0.0, %v313
    %v315 = vpop.f32.mrb[0].mxu0
    %316 = vmatprep.mubr.f32.mxu0 0.0
    %317 = vmatmul.mubr.f32.gmra.mrb[0].mxu0 %v184
    %v318 = vpop.f32.mrb[0].mxu0
    %v319 = vadd.f32 0.0, %v318
    %v320 = vpop.f32.mrb[0].mxu0
    %321 = vmatprep.mubr.f32.mxu0 0.0
    %322 = vmatmul.mubr.f32.gmra.mrb[0].mxu0 %v185
    %v323 = vpop.f32.mrb[0].mxu0
    %v324 = vadd.f32 0.0, %v323
    %v325 = vpop.f32.mrb[0].mxu0
    %326 = vmatprep.mubr.f32.mxu0 0.0
    %327 = vmatmul.mubr.f32.gmra.mrb[0].mxu0 %v186
    %v328 = vpop.f32.mrb[0].mxu0
    %v329 = vadd.f32 0.0, %v328
    %v330 = vpop.f32.mrb[0].mxu0
    %331 = vmatprep.mubr.f32.mxu0 0.0
    %332 = vmatmul.mubr.f32.gmra.mrb[0].mxu0 %v187
    %v333 = vpop.f32.mrb[0].mxu0
    %v334 = vadd.f32 0.0, %v333
    %v335 = vpop.f32.mrb[0].mxu0
    %336 = vmatprep.mubr.f32.mxu0 0.0
    %337 = vmatmul.mubr.f32.gmra.mrb[0].mxu0 %v188
    %v338 = vpop.f32.mrb[0].mxu0
    %v339 = vadd.f32 0.0, %v338
    %v340 = vpop.f32.mrb[0].mxu0
    %341 = vmatprep.mubr.f32.mxu0 0.0
    %342 = vmatmul.mubr.f32.gmra.mrb[0].mxu0 %v189
    %v343 = vpop.f32.mrb[0].mxu0
    %v344 = vadd.f32 0.0, %v343
    %v345 = vpop.f32.mrb[0].mxu0
    %346 = vmatprep.mubr.f32.mxu0 0.0
    %347 = vmatmul.mubr.f32.gmra.mrb[0].mxu0 %v190
    %v348 = vpop.f32.mrb[0].mxu0
    %v349 = vadd.f32 0.0, %v348
    %v350 = vpop.f32.mrb[0].mxu0
    %351 = vmatprep.mubr.f32.mxu0 0.0
    %352 = vmatmul.mubr.f32.gmra.mrb[0].mxu0 %v191
    %v353 = vpop.f32.mrb[0].mxu0
    %v354 = vadd.f32 0.0, %v353
    %v355 = vpop.f32.mrb[0].mxu0
    %356 = vmatprep.mubr.f32.mxu0 0.0
    %357 = vmatmul.mubr.f32.gmra.mrb[0].mxu0 %v192
    %v358 = vpop.f32.mrb[0].mxu0
    %v359 = vadd.f32 0.0, %v358
    %v360 = vpop.f32.mrb[0].mxu0
    %361 = vmatprep.mubr.f32.mxu0 0.0
    %362 = vmatmul.mubr.f32.gmra.mrb[0].mxu0 %v193
    %v363 = vpop.f32.mrb[0].mxu0
    %v364 = vadd.f32 0.0, %v363
    %v365 = vpop.f32.mrb[0].mxu0
    %366 = vmatprep.mubr.f32.mxu0 0.0
    %367 = vmatmul.mubr.f32.gmra.mrb[0].mxu0 %v194
    %v368 = vpop.f32.mrb[0].mxu0
    %v369 = vadd.f32 0.0, %v368
    %v370 = vpop.f32.mrb[0].mxu0
    %371 = vmatprep.mubr.f32.mxu0 0.0
    %372 = vmatmul.mubr.f32.gmra.mrb[0].mxu0 %v195
    %v373 = vpop.f32.mrb[0].mxu0
    %v374 = vadd.f32 0.0, %v373
    %v375 = vpop.f32.mrb[0].mxu0
    %376 = vmatprep.mubr.f32.mxu0 0.0
    %377 = vmatmul.mubr.f32.gmra.mrb[0].mxu0 %v196
    %v378 = vpop.f32.mrb[0].mxu0
    %v379 = vadd.f32 0.0, %v378
    %v380 = vpop.f32.mrb[0].mxu0
    %381 = vmatprep.mubr.f32.mxu0 0.0
    %382 = vmatmul.mubr.f32.gmra.mrb[0].mxu0 %v197
    %v383 = vpop.f32.mrb[0].mxu0
    %v384 = vadd.f32 0.0, %v383
    %v385 = vpop.f32.mrb[0].mxu0
    %386 = vmatprep.mubr.f32.mxu0 0.0
    %387 = vmatmul.mubr.f32.gmra.mrb[0].mxu0 %v198
    %v388 = vpop.f32.mrb[0].mxu0
    %v389 = vadd.f32 0.0, %v388
    %v390 = vpop.f32.mrb[0].mxu0
    %391 = vmatprep.mubr.f32.mxu0 0.0
    %392 = vmatmul.mubr.f32.gmra.mrb[0].mxu0 %v199
    %v393 = vpop.f32.mrb[0].mxu0
    %v394 = vadd.f32 0.0, %v393
    %v395 = vpop.f32.mrb[0].mxu0
    %396 = vmatprep.mubr.f32.mxu0 0.0
    %397 = vmatmul.mubr.f32.gmra.mrb[0].mxu0 %v200
    %v398 = vpop.f32.mrb[0].mxu0
    %v399 = vadd.f32 0.0, %v398
    %v400 = vpop.f32.mrb[0].mxu0
    %401 = vmatprep.mubr.f32.mxu0 0.0
    %402 = vmatmul.mubr.f32.gmra.mrb[0].mxu0 %v201
    %v403 = vpop.f32.mrb[0].mxu0
    %v404 = vadd.f32 0.0, %v403
    %v405 = vpop.f32.mrb[0].mxu0
    %406 = vmatprep.mubr.f32.mxu0 0.0
    %407 = vmatmul.mubr.f32.gmra.mrb[0].mxu0 %v202
    %v408 = vpop.f32.mrb[0].mxu0
    %v409 = vadd.f32 0.0, %v408
    %v410 = vpop.f32.mrb[0].mxu0
    %411 = vmatprep.mubr.f32.mxu0 0.0
    %412 = vmatmul.mubr.f32.gmra.mrb[0].mxu0 %v203
    %v413 = vpop.f32.mrb[0].mxu0
    %v414 = vadd.f32 0.0, %v413
    %v415 = vpop.f32.mrb[0].mxu0
    %416 = vmatprep.mubr.f32.mxu0 0.0
    %417 = vmatmul.mubr.f32.gmra.mrb[0].mxu0 %v204
    %v418 = vpop.f32.mrb[0].mxu0
    %v419 = vadd.f32 0.0, %v418
    %v420 = vpop.f32.mrb[0].mxu0
    %421 = vmatprep.mubr.f32.mxu0 0.0
    %422 = vmatmul.mubr.f32.gmra.mrb[0].mxu0 %v205
    %v423 = vpop.f32.mrb[0].mxu0
    %v424 = vadd.f32 0.0, %v423
    %v425 = vpop.f32.mrb[0].mxu0
    %426 = vmatprep.mubr.f32.mxu0 0.0
    %427 = vmatmul.mubr.f32.gmra.mrb[0].mxu0 %v206
    %v428 = vpop.f32.mrb[0].mxu0
    %v429 = vadd.f32 0.0, %v428
    %v430 = vpop.f32.mrb[0].mxu0
    %431 = vmatprep.mubr.f32.mxu0 0.0
    %432 = vmatmul.mubr.f32.gmra.mrb[0].mxu0 %v207
    %v433 = vpop.f32.mrb[0].mxu0
    %v434 = vadd.f32 0.0, %v433
    %v435 = vpop.f32.mrb[0].mxu0
    %436 = vmatprep.mubr.f32.mxu0 0.0
    %437 = vmatmul.mubr.f32.gmra.mrb[0].mxu0 %v208
    %v438 = vpop.f32.mrb[0].mxu0
    %v439 = vadd.f32 0.0, %v438
    %v440 = vpop.f32.mrb[0].mxu0
    %441 = vmatprep.mubr.f32.mxu0 0.0
    %442 = vmatmul.mubr.f32.gmra.mrb[0].mxu0 %v209
    %v443 = vpop.f32.mrb[0].mxu0
    %v444 = vadd.f32 0.0, %v443
    %v445 = vpop.f32.mrb[0].mxu0
    %446 = vmatprep.mubr.f32.mxu0 0.0
    %447 = vmatmul.mubr.f32.gmra.mrb[0].mxu0 %v210
    %v448 = vpop.f32.mrb[0].mxu0
    %v449 = vadd.f32 0.0, %v448
    %v450 = vpop.f32.mrb[0].mxu0
    %451 = vdwg.mxu0
    %v452 = vlaneseq
    %v453 = vand.u32 %v452, 127
    %vm454 = vcmp.lt.s32.totalorder %v453, 3
    %v455 = vsel %vm454, %v294, -inf
    %v456 = vsel %vm454, %v299, -inf
    %v457 = vsel %vm454, %v304, -inf
    %v458 = vsel %vm454, %v309, -inf
    %v459 = vsel %vm454, %v314, -inf
    %v460 = vsel %vm454, %v319, -inf
    %v461 = vsel %vm454, %v324, -inf
    %v462 = vsel %vm454, %v329, -inf
    %v463 = vsel %vm454, %v334, -inf
    %v464 = vsel %vm454, %v339, -inf
    %v465 = vsel %vm454, %v344, -inf
    %v466 = vsel %vm454, %v349, -inf
    %v467 = vsel %vm454, %v354, -inf
    %v468 = vsel %vm454, %v359, -inf
    %v469 = vsel %vm454, %v364, -inf
    %v470 = vsel %vm454, %v369, -inf
    %v471 = vsel %vm454, %v374, -inf
    %v472 = vsel %vm454, %v379, -inf
    %v473 = vsel %vm454, %v384, -inf
    %v474 = vsel %vm454, %v389, -inf
    %v475 = vsel %vm454, %v394, -inf
    %v476 = vsel %vm454, %v399, -inf
    %v477 = vsel %vm454, %v404, -inf
    %v478 = vsel %vm454, %v409, -inf
    %v479 = vsel %vm454, %v414, -inf
    %v480 = vsel %vm454, %v419, -inf
    %v481 = vsel %vm454, %v424, -inf
    %v482 = vsel %vm454, %v429, -inf
    %v483 = vsel %vm454, %v434, -inf
    %v484 = vsel %vm454, %v439, -inf
    %v485 = vsel %vm454, %v444, -inf
    %v486 = vsel %vm454, %v449, -inf
    %487 = vmax.xlane.f32.xlu0 %v455
    %v488 = vpop.xlane.xlu0 %487
    %489 = vmax.xlane.f32.xlu0 %v456
    %v490 = vpop.xlane.xlu0 %489
    %491 = vmax.xlane.f32.xlu0 %v457
    %v492 = vpop.xlane.xlu0 %491
    %493 = vmax.xlane.f32.xlu0 %v458
    %v494 = vpop.xlane.xlu0 %493
    %495 = vmax.xlane.f32.xlu0 %v459
    %v496 = vpop.xlane.xlu0 %495
    %497 = vmax.xlane.f32.xlu0 %v460
    %v498 = vpop.xlane.xlu0 %497
    %499 = vmax.xlane.f32.xlu0 %v461
    %v500 = vpop.xlane.xlu0 %499
    %501 = vmax.xlane.f32.xlu0 %v462
    %v502 = vpop.xlane.xlu0 %501
    %503 = vmax.xlane.f32.xlu0 %v463
    %v504 = vpop.xlane.xlu0 %503
    %505 = vmax.xlane.f32.xlu0 %v464
    %v506 = vpop.xlane.xlu0 %505
    %507 = vmax.xlane.f32.xlu0 %v465
    %v508 = vpop.xlane.xlu0 %507
    %509 = vmax.xlane.f32.xlu0 %v466
    %v510 = vpop.xlane.xlu0 %509
    %511 = vmax.xlane.f32.xlu0 %v467
    %v512 = vpop.xlane.xlu0 %511
    %513 = vmax.xlane.f32.xlu0 %v468
    %v514 = vpop.xlane.xlu0 %513
    %515 = vmax.xlane.f32.xlu0 %v469
    %v516 = vpop.xlane.xlu0 %515
    %517 = vmax.xlane.f32.xlu0 %v470
    %v518 = vpop.xlane.xlu0 %517
    %519 = vmax.xlane.f32.xlu0 %v471
    %v520 = vpop.xlane.xlu0 %519
    %521 = vmax.xlane.f32.xlu0 %v472
    %v522 = vpop.xlane.xlu0 %521
    %523 = vmax.xlane.f32.xlu0 %v473
    %v524 = vpop.xlane.xlu0 %523
    %525 = vmax.xlane.f32.xlu0 %v474
    %v526 = vpop.xlane.xlu0 %525
    %527 = vmax.xlane.f32.xlu0 %v475
    %v528 = vpop.xlane.xlu0 %527
    %529 = vmax.xlane.f32.xlu0 %v476
    %v530 = vpop.xlane.xlu0 %529
    %531 = vmax.xlane.f32.xlu0 %v477
    %v532 = vpop.xlane.xlu0 %531
    %533 = vmax.xlane.f32.xlu0 %v478
    %v534 = vpop.xlane.xlu0 %533
    %535 = vmax.xlane.f32.xlu0 %v479
    %v536 = vpop.xlane.xlu0 %535
    %537 = vmax.xlane.f32.xlu0 %v480
    %v538 = vpop.xlane.xlu0 %537
    %539 = vmax.xlane.f32.xlu0 %v481
    %v540 = vpop.xlane.xlu0 %539
    %541 = vmax.xlane.f32.xlu0 %v482
    %v542 = vpop.xlane.xlu0 %541
    %543 = vmax.xlane.f32.xlu0 %v483
    %v544 = vpop.xlane.xlu0 %543
    %545 = vmax.xlane.f32.xlu0 %v484
    %v546 = vpop.xlane.xlu0 %545
    %547 = vmax.xlane.f32.xlu0 %v485
    %v548 = vpop.xlane.xlu0 %547
    %549 = vmax.xlane.f32.xlu0 %v486
    %v550 = vpop.xlane.xlu0 %549
    %v551 = vsub.f32 %v294, %v488
    %v552 = vsub.f32 %v299, %v490
    %v553 = vsub.f32 %v304, %v492
    %v554 = vsub.f32 %v309, %v494
    %v555 = vsub.f32 %v314, %v496
    %v556 = vsub.f32 %v319, %v498
    %v557 = vsub.f32 %v324, %v500
    %v558 = vsub.f32 %v329, %v502
    %v559 = vsub.f32 %v334, %v504
    %v560 = vsub.f32 %v339, %v506
    %v561 = vsub.f32 %v344, %v508
    %v562 = vsub.f32 %v349, %v510
    %v563 = vsub.f32 %v354, %v512
    %v564 = vsub.f32 %v359, %v514
    %v565 = vsub.f32 %v364, %v516
    %v566 = vsub.f32 %v369, %v518
    %v567 = vsub.f32 %v374, %v520
    %v568 = vsub.f32 %v379, %v522
    %v569 = vsub.f32 %v384, %v524
    %v570 = vsub.f32 %v389, %v526
    %v571 = vsub.f32 %v394, %v528
    %v572 = vsub.f32 %v399, %v530
    %v573 = vsub.f32 %v404, %v532
    %v574 = vsub.f32 %v409, %v534
    %v575 = vsub.f32 %v414, %v536
    %v576 = vsub.f32 %v419, %v538
    %v577 = vsub.f32 %v424, %v540
    %v578 = vsub.f32 %v429, %v542
    %v579 = vsub.f32 %v434, %v544
    %v580 = vsub.f32 %v439, %v546
    %v581 = vsub.f32 %v444, %v548
    %v582 = vsub.f32 %v449, %v550
    %v583 = vmul.f32 %v551, 1.442695
    %v584 = vpow.pop %v583
    %v585 = vmul.f32 %v552, 1.442695
    %v586 = vpow.pop %v585
    %v587 = vmul.f32 %v553, 1.442695
    %v588 = vpow.pop %v587
    %v589 = vmul.f32 %v554, 1.442695
    %v590 = vpow.pop %v589
    %v591 = vmul.f32 %v555, 1.442695
    %v592 = vpow.pop %v591
    %v593 = vmul.f32 %v556, 1.442695
    %v594 = vpow.pop %v593
    %v595 = vmul.f32 %v557, 1.442695
    %v596 = vpow.pop %v595
    %v597 = vmul.f32 %v558, 1.442695
    %v598 = vpow.pop %v597
    %v599 = vmul.f32 %v559, 1.442695
    %v600 = vpow.pop %v599
    %v601 = vmul.f32 %v560, 1.442695
    %v602 = vpow.pop %v601
    %v603 = vmul.f32 %v561, 1.442695
    %v604 = vpow.pop %v603
    %v605 = vmul.f32 %v562, 1.442695
    %v606 = vpow.pop %v605
    %v607 = vmul.f32 %v563, 1.442695
    %v608 = vpow.pop %v607
    %v609 = vmul.f32 %v564, 1.442695
    %v610 = vpow.pop %v609
    %v611 = vmul.f32 %v565, 1.442695
    %v612 = vpow.pop %v611
    %v613 = vmul.f32 %v566, 1.442695
    %v614 = vpow.pop %v613
    %v615 = vmul.f32 %v567, 1.442695
    %v616 = vpow.pop %v615
    %v617 = vmul.f32 %v568, 1.442695
    %v618 = vpow.pop %v617
    %v619 = vmul.f32 %v569, 1.442695
    %v620 = vpow.pop %v619
    %v621 = vmul.f32 %v570, 1.442695
    %v622 = vpow.pop %v621
    %v623 = vmul.f32 %v571, 1.442695
    %v624 = vpow.pop %v623
    %v625 = vmul.f32 %v572, 1.442695
    %v626 = vpow.pop %v625
    %v627 = vmul.f32 %v573, 1.442695
    %v628 = vpow.pop %v627
    %v629 = vmul.f32 %v574, 1.442695
    %v630 = vpow.pop %v629
    %v631 = vmul.f32 %v575, 1.442695
    %v632 = vpow.pop %v631
    %v633 = vmul.f32 %v576, 1.442695
    %v634 = vpow.pop %v633
    %v635 = vmul.f32 %v577, 1.442695
    %v636 = vpow.pop %v635
    %v637 = vmul.f32 %v578, 1.442695
    %v638 = vpow.pop %v637
    %v639 = vmul.f32 %v579, 1.442695
    %v640 = vpow.pop %v639
    %v641 = vmul.f32 %v580, 1.442695
    %v642 = vpow.pop %v641
    %v643 = vmul.f32 %v581, 1.442695
    %v644 = vpow.pop %v643
    %v645 = vmul.f32 %v582, 1.442695
    %v646 = vpow.pop %v645
    %v647 = vsel %vm454, %v584, 0.0
    %v648 = vsel %vm454, %v586, 0.0
    %v649 = vsel %vm454, %v588, 0.0
    %v650 = vsel %vm454, %v590, 0.0
    %v651 = vsel %vm454, %v592, 0.0
    %v652 = vsel %vm454, %v594, 0.0
    %v653 = vsel %vm454, %v596, 0.0
    %v654 = vsel %vm454, %v598, 0.0
    %v655 = vsel %vm454, %v600, 0.0
    %v656 = vsel %vm454, %v602, 0.0
    %v657 = vsel %vm454, %v604, 0.0
    %v658 = vsel %vm454, %v606, 0.0
    %v659 = vsel %vm454, %v608, 0.0
    %v660 = vsel %vm454, %v610, 0.0
    %v661 = vsel %vm454, %v612, 0.0
    %v662 = vsel %vm454, %v614, 0.0
    %v663 = vsel %vm454, %v616, 0.0
    %v664 = vsel %vm454, %v618, 0.0
    %v665 = vsel %vm454, %v620, 0.0
    %v666 = vsel %vm454, %v622, 0.0
    %v667 = vsel %vm454, %v624, 0.0
    %v668 = vsel %vm454, %v626, 0.0
    %v669 = vsel %vm454, %v628, 0.0
    %v670 = vsel %vm454, %v630, 0.0
    %v671 = vsel %vm454, %v632, 0.0
    %v672 = vsel %vm454, %v634, 0.0
    %v673 = vsel %vm454, %v636, 0.0
    %v674 = vsel %vm454, %v638, 0.0
    %v675 = vsel %vm454, %v640, 0.0
    %v676 = vsel %vm454, %v642, 0.0
    %v677 = vsel %vm454, %v644, 0.0
    %v678 = vsel %vm454, %v646, 0.0
    %679 = vadd.xlane.f32.xlu0 %v647
    %v680 = vpop.xlane.xlu0 %679
    %681 = vadd.xlane.f32.xlu0 %v648
    %v682 = vpop.xlane.xlu0 %681
    %683 = vadd.xlane.f32.xlu0 %v649
    %v684 = vpop.xlane.xlu0 %683
    %685 = vadd.xlane.f32.xlu0 %v650
    %v686 = vpop.xlane.xlu0 %685
    %687 = vadd.xlane.f32.xlu0 %v651
    %v688 = vpop.xlane.xlu0 %687
    %689 = vadd.xlane.f32.xlu0 %v652
    %v690 = vpop.xlane.xlu0 %689
    %691 = vadd.xlane.f32.xlu0 %v653
    %v692 = vpop.xlane.xlu0 %691
    %693 = vadd.xlane.f32.xlu0 %v654
    %v694 = vpop.xlane.xlu0 %693
    %695 = vadd.xlane.f32.xlu0 %v655
    %v696 = vpop.xlane.xlu0 %695
    %697 = vadd.xlane.f32.xlu0 %v656
    %v698 = vpop.xlane.xlu0 %697
    %699 = vadd.xlane.f32.xlu0 %v657
    %v700 = vpop.xlane.xlu0 %699
    %701 = vadd.xlane.f32.xlu0 %v658
    %v702 = vpop.xlane.xlu0 %701
    %703 = vadd.xlane.f32.xlu0 %v659
    %v704 = vpop.xlane.xlu0 %703
    %705 = vadd.xlane.f32.xlu0 %v660
    %v706 = vpop.xlane.xlu0 %705
    %707 = vadd.xlane.f32.xlu0 %v661
    %v708 = vpop.xlane.xlu0 %707
    %709 = vadd.xlane.f32.xlu0 %v662
    %v710 = vpop.xlane.xlu0 %709
    %711 = vadd.xlane.f32.xlu0 %v663
    %v712 = vpop.xlane.xlu0 %711
    %713 = vadd.xlane.f32.xlu0 %v664
    %v714 = vpop.xlane.xlu0 %713
    %715 = vadd.xlane.f32.xlu0 %v665
    %v716 = vpop.xlane.xlu0 %715
    %717 = vadd.xlane.f32.xlu0 %v666
    %v718 = vpop.xlane.xlu0 %717
    %719 = vadd.xlane.f32.xlu0 %v667
    %v720 = vpop.xlane.xlu0 %719
    %721 = vadd.xlane.f32.xlu0 %v668
    %v722 = vpop.xlane.xlu0 %721
    %723 = vadd.xlane.f32.xlu0 %v669
    %v724 = vpop.xlane.xlu0 %723
    %725 = vadd.xlane.f32.xlu0 %v670
    %v726 = vpop.xlane.xlu0 %725
    %727 = vadd.xlane.f32.xlu0 %v671
    %v728 = vpop.xlane.xlu0 %727
    %729 = vadd.xlane.f32.xlu0 %v672
    %v730 = vpop.xlane.xlu0 %729
    %731 = vadd.xlane.f32.xlu0 %v673
    %v732 = vpop.xlane.xlu0 %731
    %733 = vadd.xlane.f32.xlu0 %v674
    %v734 = vpop.xlane.xlu0 %733
    %735 = vadd.xlane.f32.xlu0 %v675
    %v736 = vpop.xlane.xlu0 %735
    %737 = vadd.xlane.f32.xlu0 %v676
    %v738 = vpop.xlane.xlu0 %737
    %739 = vadd.xlane.f32.xlu0 %v677
    %v740 = vpop.xlane.xlu0 %739
    %741 = vadd.xlane.f32.xlu0 %v678
    %v742 = vpop.xlane.xlu0 %741
    %v743 = vrcp.pop %v680
    %v744 = vmul.f32 %v647, %v743
    %v745 = vrcp.pop %v682
    %v746 = vmul.f32 %v648, %v745
    %v747 = vrcp.pop %v684
    %v748 = vmul.f32 %v649, %v747
    %v749 = vrcp.pop %v686
    %v750 = vmul.f32 %v650, %v749
    %v751 = vrcp.pop %v688
    %v752 = vmul.f32 %v651, %v751
    %v753 = vrcp.pop %v690
    %v754 = vmul.f32 %v652, %v753
    %v755 = vrcp.pop %v692
    %v756 = vmul.f32 %v653, %v755
    %v757 = vrcp.pop %v694
    %v758 = vmul.f32 %v654, %v757
    %v759 = vrcp.pop %v696
    %v760 = vmul.f32 %v655, %v759
    %v761 = vrcp.pop %v698
    %v762 = vmul.f32 %v656, %v761
    %v763 = vrcp.pop %v700
    %v764 = vmul.f32 %v657, %v763
    %v765 = vrcp.pop %v702
    %v766 = vmul.f32 %v658, %v765
    %v767 = vrcp.pop %v704
    %v768 = vmul.f32 %v659, %v767
    %v769 = vrcp.pop %v706
    %v770 = vmul.f32 %v660, %v769
    %v771 = vrcp.pop %v708
    %v772 = vmul.f32 %v661, %v771
    %v773 = vrcp.pop %v710
    %v774 = vmul.f32 %v662, %v773
    %v775 = vrcp.pop %v712
    %v776 = vmul.f32 %v663, %v775
    %v777 = vrcp.pop %v714
    %v778 = vmul.f32 %v664, %v777
    %v779 = vrcp.pop %v716
    %v780 = vmul.f32 %v665, %v779
    %v781 = vrcp.pop %v718
    %v782 = vmul.f32 %v666, %v781
    %v783 = vrcp.pop %v720
    %v784 = vmul.f32 %v667, %v783
    %v785 = vrcp.pop %v722
    %v786 = vmul.f32 %v668, %v785
    %v787 = vrcp.pop %v724
    %v788 = vmul.f32 %v669, %v787
    %v789 = vrcp.pop %v726
    %v790 = vmul.f32 %v670, %v789
    %v791 = vrcp.pop %v728
    %v792 = vmul.f32 %v671, %v791
    %v793 = vrcp.pop %v730
    %v794 = vmul.f32 %v672, %v793
    %v795 = vrcp.pop %v732
    %v796 = vmul.f32 %v673, %v795
    %v797 = vrcp.pop %v734
    %v798 = vmul.f32 %v674, %v797
    %v799 = vrcp.pop %v736
    %v800 = vmul.f32 %v675, %v799
    %v801 = vrcp.pop %v738
    %v802 = vmul.f32 %v676, %v801
    %v803 = vrcp.pop %v740
    %v804 = vmul.f32 %v677, %v803
    %v805 = vrcp.pop %v742
    %v806 = vmul.f32 %v678, %v805
    %v807 = vld [vmem:[%s3] sm:$0xff]
    %v808 = vld [vmem:[%s3 + $0x8] sm:$0xff]
    %v809 = vld [vmem:[%s3 + $0x10] sm:$0xff]
    %v810 = vld [vmem:[%s3 + $0x18] sm:$0xff]
    %v811 = vld [vmem:[%s3 + $0x20] sm:$0xff]
    %v812 = vld [vmem:[%s3 + $0x28] sm:$0xff]
    %v813 = vld [vmem:[%s3 + $0x30] sm:$0xff]
    %v814 = vld [vmem:[%s3 + $0x38] sm:$0xff]
    %v815 = vld [vmem:[%s3 + $0x40] sm:$0xff]
    %v816 = vld [vmem:[%s3 + $0x48] sm:$0xff]
    %v817 = vld [vmem:[%s3 + $0x50] sm:$0xff]
    %v818 = vld [vmem:[%s3 + $0x58] sm:$0xff]
    %v819 = vld [vmem:[%s3 + $0x60] sm:$0xff]
    %v820 = vld [vmem:[%s3 + $0x68] sm:$0xff]
    %v821 = vld [vmem:[%s3 + $0x70] sm:$0xff]
    %v822 = vld [vmem:[%s3 + $0x78] sm:$0xff]
    %823 = vmatprep.subr.mxu0 0.0
    %824 = vmatpush1.msra.mxu0 %v807
    %825 = vmatprep.subr.mxu0 0.0
    %826 = vmatpush1.msra.mxu0 %v808
    %827 = vmatprep.subr.mxu0 0.0
    %828 = vmatpush1.msra.mxu0 %v809
    %829 = vmatprep.subr.mxu0 0.0
    %830 = vmatpush1.msra.mxu0 %v810
    %831 = vmatprep.subr.mxu0 0.0
    %832 = vmatpush1.msra.mxu0 %v811
    %833 = vmatprep.subr.mxu0 0.0
    %834 = vmatpush1.msra.mxu0 %v812
    %835 = vmatprep.subr.mxu0 0.0
    %836 = vmatpush1.msra.mxu0 %v813
    %837 = vmatprep.subr.mxu0 0.0
    %838 = vmatpush1.msra.mxu0 %v814
    %839 = vmatprep.subr.mxu0 0.0
    %840 = vmatpush1.msra.mxu0 %v815
    %841 = vmatprep.subr.mxu0 0.0
    %842 = vmatpush1.msra.mxu0 %v816
    %843 = vmatprep.subr.mxu0 0.0
    %844 = vmatpush1.msra.mxu0 %v817
    %845 = vmatprep.subr.mxu0 0.0
    %846 = vmatpush1.msra.mxu0 %v818
    %847 = vmatprep.subr.mxu0 0.0
    %848 = vmatpush1.msra.mxu0 %v819
    %849 = vmatprep.subr.mxu0 0.0
    %850 = vmatpush1.msra.mxu0 %v820
    %851 = vmatprep.subr.mxu0 0.0
    %852 = vmatpush1.msra.mxu0 %v821
    %853 = vmatprep.subr.mxu0 0.0
    %854 = vmatpush1.msra.mxu0 %v822
    %855 = vmatprep.subr.mxu0 0.0
    %856 = vmatpush1.msra.mxu0 0.0
    %857 = vmatprep.subr.mxu0 0.0
    %858 = vmatpush1.msra.mxu0 0.0
    %859 = vmatprep.subr.mxu0 0.0
    %860 = vmatpush1.msra.mxu0 0.0
    %861 = vmatprep.subr.mxu0 0.0
    %862 = vmatpush1.msra.mxu0 0.0
    %863 = vmatprep.subr.mxu0 0.0
    %864 = vmatpush1.msra.mxu0 0.0
    %865 = vmatprep.subr.mxu0 0.0
    %866 = vmatpush1.msra.mxu0 0.0
    %867 = vmatprep.subr.mxu0 0.0
    %868 = vmatpush1.msra.mxu0 0.0
    %869 = vmatprep.subr.mxu0 0.0
    %870 = vmatpush1.msra.mxu0 0.0
    %871 = vmatprep.subr.mxu0 0.0
    %872 = vmatpush1.msra.mxu0 0.0
    %873 = vmatprep.subr.mxu0 0.0
    %874 = vmatpush1.msra.mxu0 0.0
    %875 = vmatprep.subr.mxu0 0.0
    %876 = vmatpush1.msra.mxu0 0.0
    %877 = vmatprep.subr.mxu0 0.0
    %878 = vmatpush1.msra.mxu0 0.0
    %879 = vmatprep.subr.mxu0 0.0
    %880 = vmatpush1.msra.mxu0 0.0
    %881 = vmatprep.subr.mxu0 0.0
    %882 = vmatpush1.msra.mxu0 0.0
    %883 = vmatprep.subr.mxu0 0.0
    %884 = vmatpush1.msra.mxu0 0.0
    %885 = vmatprep.subr.mxu0 0.0
    %886 = vmatpush1.msra.mxu0 0.0
    %887 = vmatprep.mubr.f32.mxu0 0.0
    %888 = vmatmul.mubr.f32.gmra.mrb[0].mxu0 %v744
    %v889 = vpop.f32.mrb[0].mxu0
    %v890 = vadd.f32 0.0, %v889
    %v891 = vpop.f32.mrb[0].mxu0
    %892 = vmatprep.mubr.f32.mxu0 0.0
    %893 = vmatmul.mubr.f32.gmra.mrb[0].mxu0 %v746
    %v894 = vpop.f32.mrb[0].mxu0
    %v895 = vadd.f32 0.0, %v894
    %v896 = vpop.f32.mrb[0].mxu0
    %897 = vmatprep.mubr.f32.mxu0 0.0
    %898 = vmatmul.mubr.f32.gmra.mrb[0].mxu0 %v748
    %v899 = vpop.f32.mrb[0].mxu0
    %v900 = vadd.f32 0.0, %v899
    %v901 = vpop.f32.mrb[0].mxu0
    %902 = vmatprep.mubr.f32.mxu0 0.0
    %903 = vmatmul.mubr.f32.gmra.mrb[0].mxu0 %v750
    %v904 = vpop.f32.mrb[0].mxu0
    %v905 = vadd.f32 0.0, %v904
    %v906 = vpop.f32.mrb[0].mxu0
    %907 = vmatprep.mubr.f32.mxu0 0.0
    %908 = vmatmul.mubr.f32.gmra.mrb[0].mxu0 %v752
    %v909 = vpop.f32.mrb[0].mxu0
    %v910 = vadd.f32 0.0, %v909
    %v911 = vpop.f32.mrb[0].mxu0
    %912 = vmatprep.mubr.f32.mxu0 0.0
    %913 = vmatmul.mubr.f32.gmra.mrb[0].mxu0 %v754
    %v914 = vpop.f32.mrb[0].mxu0
    %v915 = vadd.f32 0.0, %v914
    %v916 = vpop.f32.mrb[0].mxu0
    %917 = vmatprep.mubr.f32.mxu0 0.0
    %918 = vmatmul.mubr.f32.gmra.mrb[0].mxu0 %v756
    %v919 = vpop.f32.mrb[0].mxu0
    %v920 = vadd.f32 0.0, %v919
    %v921 = vpop.f32.mrb[0].mxu0
    %922 = vmatprep.mubr.f32.mxu0 0.0
    %923 = vmatmul.mubr.f32.gmra.mrb[0].mxu0 %v758
    %v924 = vpop.f32.mrb[0].mxu0
    %v925 = vadd.f32 0.0, %v924
    %v926 = vpop.f32.mrb[0].mxu0
    %927 = vmatprep.mubr.f32.mxu0 0.0
    %928 = vmatmul.mubr.f32.gmra.mrb[0].mxu0 %v760
    %v929 = vpop.f32.mrb[0].mxu0
    %v930 = vadd.f32 0.0, %v929
    %v931 = vpop.f32.mrb[0].mxu0
    %932 = vmatprep.mubr.f32.mxu0 0.0
    %933 = vmatmul.mubr.f32.gmra.mrb[0].mxu0 %v762
    %v934 = vpop.f32.mrb[0].mxu0
    %v935 = vadd.f32 0.0, %v934
    %v936 = vpop.f32.mrb[0].mxu0
    %937 = vmatprep.mubr.f32.mxu0 0.0
    %938 = vmatmul.mubr.f32.gmra.mrb[0].mxu0 %v764
    %v939 = vpop.f32.mrb[0].mxu0
    %v940 = vadd.f32 0.0, %v939
    %v941 = vpop.f32.mrb[0].mxu0
    %942 = vmatprep.mubr.f32.mxu0 0.0
    %943 = vmatmul.mubr.f32.gmra.mrb[0].mxu0 %v766
    %v944 = vpop.f32.mrb[0].mxu0
    %v945 = vadd.f32 0.0, %v944
    %v946 = vpop.f32.mrb[0].mxu0
    %947 = vmatprep.mubr.f32.mxu0 0.0
    %948 = vmatmul.mubr.f32.gmra.mrb[0].mxu0 %v768
    %v949 = vpop.f32.mrb[0].mxu0
    %v950 = vadd.f32 0.0, %v949
    %v951 = vpop.f32.mrb[0].mxu0
    %952 = vmatprep.mubr.f32.mxu0 0.0
    %953 = vmatmul.mubr.f32.gmra.mrb[0].mxu0 %v770
    %v954 = vpop.f32.mrb[0].mxu0
    %v955 = vadd.f32 0.0, %v954
    %v956 = vpop.f32.mrb[0].mxu0
    %957 = vmatprep.mubr.f32.mxu0 0.0
    %958 = vmatmul.mubr.f32.gmra.mrb[0].mxu0 %v772
    %v959 = vpop.f32.mrb[0].mxu0
    %v960 = vadd.f32 0.0, %v959
    %v961 = vpop.f32.mrb[0].mxu0
    %962 = vmatprep.mubr.f32.mxu0 0.0
    %963 = vmatmul.mubr.f32.gmra.mrb[0].mxu0 %v774
    %v964 = vpop.f32.mrb[0].mxu0
    %v965 = vadd.f32 0.0, %v964
    %v966 = vpop.f32.mrb[0].mxu0
    %967 = vmatprep.mubr.f32.mxu0 0.0
    %968 = vmatmul.mubr.f32.gmra.mrb[0].mxu0 %v776
    %v969 = vpop.f32.mrb[0].mxu0
    %v970 = vadd.f32 0.0, %v969
    %v971 = vpop.f32.mrb[0].mxu0
    %972 = vmatprep.mubr.f32.mxu0 0.0
    %973 = vmatmul.mubr.f32.gmra.mrb[0].mxu0 %v778
    %v974 = vpop.f32.mrb[0].mxu0
    %v975 = vadd.f32 0.0, %v974
    %v976 = vpop.f32.mrb[0].mxu0
    %977 = vmatprep.mubr.f32.mxu0 0.0
    %978 = vmatmul.mubr.f32.gmra.mrb[0].mxu0 %v780
    %v979 = vpop.f32.mrb[0].mxu0
    %v980 = vadd.f32 0.0, %v979
    %v981 = vpop.f32.mrb[0].mxu0
    %982 = vmatprep.mubr.f32.mxu0 0.0
    %983 = vmatmul.mubr.f32.gmra.mrb[0].mxu0 %v782
    %v984 = vpop.f32.mrb[0].mxu0
    %v985 = vadd.f32 0.0, %v984
    %v986 = vpop.f32.mrb[0].mxu0
    %987 = vmatprep.mubr.f32.mxu0 0.0
    %988 = vmatmul.mubr.f32.gmra.mrb[0].mxu0 %v784
    %v989 = vpop.f32.mrb[0].mxu0
    %v990 = vadd.f32 0.0, %v989
    %v991 = vpop.f32.mrb[0].mxu0
    %992 = vmatprep.mubr.f32.mxu0 0.0
    %993 = vmatmul.mubr.f32.gmra.mrb[0].mxu0 %v786
    %v994 = vpop.f32.mrb[0].mxu0
    %v995 = vadd.f32 0.0, %v994
    %v996 = vpop.f32.mrb[0].mxu0
    %997 = vmatprep.mubr.f32.mxu0 0.0
    %998 = vmatmul.mubr.f32.gmra.mrb[0].mxu0 %v788
    %v999 = vpop.f32.mrb[0].mxu0
    %v1000 = vadd.f32 0.0, %v999
    %v1001 = vpop.f32.mrb[0].mxu0
    %1002 = vmatprep.mubr.f32.mxu0 0.0
    %1003 = vmatmul.mubr.f32.gmra.mrb[0].mxu0 %v790
    %v1004 = vpop.f32.mrb[0].mxu0
    %v1005 = vadd.f32 0.0, %v1004
    %v1006 = vpop.f32.mrb[0].mxu0
    %1007 = vmatprep.mubr.f32.mxu0 0.0
    %1008 = vmatmul.mubr.f32.gmra.mrb[0].mxu0 %v792
    %v1009 = vpop.f32.mrb[0].mxu0
    %v1010 = vadd.f32 0.0, %v1009
    %v1011 = vpop.f32.mrb[0].mxu0
    %1012 = vmatprep.mubr.f32.mxu0 0.0
    %1013 = vmatmul.mubr.f32.gmra.mrb[0].mxu0 %v794
    %v1014 = vpop.f32.mrb[0].mxu0
    %v1015 = vadd.f32 0.0, %v1014
    %v1016 = vpop.f32.mrb[0].mxu0
    %1017 = vmatprep.mubr.f32.mxu0 0.0
    %1018 = vmatmul.mubr.f32.gmra.mrb[0].mxu0 %v796
    %v1019 = vpop.f32.mrb[0].mxu0
    %v1020 = vadd.f32 0.0, %v1019
    %v1021 = vpop.f32.mrb[0].mxu0
    %1022 = vmatprep.mubr.f32.mxu0 0.0
    %1023 = vmatmul.mubr.f32.gmra.mrb[0].mxu0 %v798
    %v1024 = vpop.f32.mrb[0].mxu0
    %v1025 = vadd.f32 0.0, %v1024
    %v1026 = vpop.f32.mrb[0].mxu0
    %1027 = vmatprep.mubr.f32.mxu0 0.0
    %1028 = vmatmul.mubr.f32.gmra.mrb[0].mxu0 %v800
    %v1029 = vpop.f32.mrb[0].mxu0
    %v1030 = vadd.f32 0.0, %v1029
    %v1031 = vpop.f32.mrb[0].mxu0
    %1032 = vmatprep.mubr.f32.mxu0 0.0
    %1033 = vmatmul.mubr.f32.gmra.mrb[0].mxu0 %v802
    %v1034 = vpop.f32.mrb[0].mxu0
    %v1035 = vadd.f32 0.0, %v1034
    %v1036 = vpop.f32.mrb[0].mxu0
    %1037 = vmatprep.mubr.f32.mxu0 0.0
    %1038 = vmatmul.mubr.f32.gmra.mrb[0].mxu0 %v804
    %v1039 = vpop.f32.mrb[0].mxu0
    %v1040 = vadd.f32 0.0, %v1039
    %v1041 = vpop.f32.mrb[0].mxu0
    %1042 = vmatprep.mubr.f32.mxu0 0.0
    %1043 = vmatmul.mubr.f32.gmra.mrb[0].mxu0 %v806
    %v1044 = vpop.f32.mrb[0].mxu0
    %v1045 = vadd.f32 0.0, %v1044
    %v1046 = vpop.f32.mrb[0].mxu0
    %1047 = vdwg.mxu0
    %v1048 = vld [vmem:[%s4] sm:$0xff]
    %v1049 = vld [vmem:[%s4 + $0x8] sm:$0xff]
    %v1050 = vld [vmem:[%s4 + $0x10] sm:$0xff]
    %v1051 = vld [vmem:[%s4 + $0x18] sm:$0xff]
    %v1052 = vld [vmem:[%s4 + $0x20] sm:$0xff]
    %v1053 = vld [vmem:[%s4 + $0x28] sm:$0xff]
    %v1054 = vld [vmem:[%s4 + $0x30] sm:$0xff]
    %v1055 = vld [vmem:[%s4 + $0x38] sm:$0xff]
    %v1056 = vld [vmem:[%s4 + $0x40] sm:$0xff]
    %v1057 = vld [vmem:[%s4 + $0x48] sm:$0xff]
    %v1058 = vld [vmem:[%s4 + $0x50] sm:$0xff]
    %v1059 = vld [vmem:[%s4 + $0x58] sm:$0xff]
    %v1060 = vld [vmem:[%s4 + $0x60] sm:$0xff]
    %v1061 = vld [vmem:[%s4 + $0x68] sm:$0xff]
    %v1062 = vld [vmem:[%s4 + $0x70] sm:$0xff]
    %v1063 = vld [vmem:[%s4 + $0x78] sm:$0xff]
    %1064 = vmatprep.subr.mxu0 0.0
    %1065 = vmatpush1.msra.mxu0 %v1048
    %1066 = vmatprep.subr.mxu0 0.0
    %1067 = vmatpush1.msra.mxu0 %v1049
    %1068 = vmatprep.subr.mxu0 0.0
    %1069 = vmatpush1.msra.mxu0 %v1050
    %1070 = vmatprep.subr.mxu0 0.0
    %1071 = vmatpush1.msra.mxu0 %v1051
    %1072 = vmatprep.subr.mxu0 0.0
    %1073 = vmatpush1.msra.mxu0 %v1052
    %1074 = vmatprep.subr.mxu0 0.0
    %1075 = vmatpush1.msra.mxu0 %v1053
    %1076 = vmatprep.subr.mxu0 0.0
    %1077 = vmatpush1.msra.mxu0 %v1054
    %1078 = vmatprep.subr.mxu0 0.0
    %1079 = vmatpush1.msra.mxu0 %v1055
    %1080 = vmatprep.subr.mxu0 0.0
    %1081 = vmatpush1.msra.mxu0 %v1056
    %1082 = vmatprep.subr.mxu0 0.0
    %1083 = vmatpush1.msra.mxu0 %v1057
    %1084 = vmatprep.subr.mxu0 0.0
    %1085 = vmatpush1.msra.mxu0 %v1058
    %1086 = vmatprep.subr.mxu0 0.0
    %1087 = vmatpush1.msra.mxu0 %v1059
    %1088 = vmatprep.subr.mxu0 0.0
    %1089 = vmatpush1.msra.mxu0 %v1060
    %1090 = vmatprep.subr.mxu0 0.0
    %1091 = vmatpush1.msra.mxu0 %v1061
    %1092 = vmatprep.subr.mxu0 0.0
    %1093 = vmatpush1.msra.mxu0 %v1062
    %1094 = vmatprep.subr.mxu0 0.0
    %1095 = vmatpush1.msra.mxu0 %v1063
    %1096 = vmatprep.subr.mxu0 0.0
    %1097 = vmatpush1.msra.mxu0 0.0
    %1098 = vmatprep.subr.mxu0 0.0
    %1099 = vmatpush1.msra.mxu0 0.0
    %1100 = vmatprep.subr.mxu0 0.0
    %1101 = vmatpush1.msra.mxu0 0.0
    %1102 = vmatprep.subr.mxu0 0.0
    %1103 = vmatpush1.msra.mxu0 0.0
    %1104 = vmatprep.subr.mxu0 0.0
    %1105 = vmatpush1.msra.mxu0 0.0
    %1106 = vmatprep.subr.mxu0 0.0
    %1107 = vmatpush1.msra.mxu0 0.0
    %1108 = vmatprep.subr.mxu0 0.0
    %1109 = vmatpush1.msra.mxu0 0.0
    %1110 = vmatprep.subr.mxu0 0.0
    %1111 = vmatpush1.msra.mxu0 0.0
    %1112 = vmatprep.subr.mxu0 0.0
    %1113 = vmatpush1.msra.mxu0 0.0
    %1114 = vmatprep.subr.mxu0 0.0
    %1115 = vmatpush1.msra.mxu0 0.0
    %1116 = vmatprep.subr.mxu0 0.0
    %1117 = vmatpush1.msra.mxu0 0.0
    %1118 = vmatprep.subr.mxu0 0.0
    %1119 = vmatpush1.msra.mxu0 0.0
    %1120 = vmatprep.subr.mxu0 0.0
    %1121 = vmatpush1.msra.mxu0 0.0
    %1122 = vmatprep.subr.mxu0 0.0
    %1123 = vmatpush1.msra.mxu0 0.0
    %1124 = vmatprep.subr.mxu0 0.0
    %1125 = vmatpush1.msra.mxu0 0.0
    %1126 = vmatprep.subr.mxu0 0.0
    %1127 = vmatpush1.msra.mxu0 0.0
    %1128 = vmatprep.mubr.f32.mxu0 0.0
    %1129 = vmatmul.mubr.f32.gmra.mrb[0].mxu0 %v744
    %v1130 = vpop.f32.mrb[0].mxu0
    %v1131 = vadd.f32 0.0, %v1130
    %v1132 = vpop.f32.mrb[0].mxu0
    %1133 = vmatprep.mubr.f32.mxu0 0.0
    %1134 = vmatmul.mubr.f32.gmra.mrb[0].mxu0 %v746
    %v1135 = vpop.f32.mrb[0].mxu0
    %v1136 = vadd.f32 0.0, %v1135
    %v1137 = vpop.f32.mrb[0].mxu0
    %1138 = vmatprep.mubr.f32.mxu0 0.0
    %1139 = vmatmul.mubr.f32.gmra.mrb[0].mxu0 %v748
    %v1140 = vpop.f32.mrb[0].mxu0
    %v1141 = vadd.f32 0.0, %v1140
    %v1142 = vpop.f32.mrb[0].mxu0
    %1143 = vmatprep.mubr.f32.mxu0 0.0
    %1144 = vmatmul.mubr.f32.gmra.mrb[0].mxu0 %v750
    %v1145 = vpop.f32.mrb[0].mxu0
    %v1146 = vadd.f32 0.0, %v1145
    %v1147 = vpop.f32.mrb[0].mxu0
    %1148 = vmatprep.mubr.f32.mxu0 0.0
    %1149 = vmatmul.mubr.f32.gmra.mrb[0].mxu0 %v752
    %v1150 = vpop.f32.mrb[0].mxu0
    %v1151 = vadd.f32 0.0, %v1150
    %v1152 = vpop.f32.mrb[0].mxu0
    %1153 = vmatprep.mubr.f32.mxu0 0.0
    %1154 = vmatmul.mubr.f32.gmra.mrb[0].mxu0 %v754
    %v1155 = vpop.f32.mrb[0].mxu0
    %v1156 = vadd.f32 0.0, %v1155
    %v1157 = vpop.f32.mrb[0].mxu0
    %1158 = vmatprep.mubr.f32.mxu0 0.0
    %1159 = vmatmul.mubr.f32.gmra.mrb[0].mxu0 %v756
    %v1160 = vpop.f32.mrb[0].mxu0
    %v1161 = vadd.f32 0.0, %v1160
    %v1162 = vpop.f32.mrb[0].mxu0
    %1163 = vmatprep.mubr.f32.mxu0 0.0
    %1164 = vmatmul.mubr.f32.gmra.mrb[0].mxu0 %v758
    %v1165 = vpop.f32.mrb[0].mxu0
    %v1166 = vadd.f32 0.0, %v1165
    %v1167 = vpop.f32.mrb[0].mxu0
    %1168 = vmatprep.mubr.f32.mxu0 0.0
    %1169 = vmatmul.mubr.f32.gmra.mrb[0].mxu0 %v760
    %v1170 = vpop.f32.mrb[0].mxu0
    %v1171 = vadd.f32 0.0, %v1170
    %v1172 = vpop.f32.mrb[0].mxu0
    %1173 = vmatprep.mubr.f32.mxu0 0.0
    %1174 = vmatmul.mubr.f32.gmra.mrb[0].mxu0 %v762
    %v1175 = vpop.f32.mrb[0].mxu0
    %v1176 = vadd.f32 0.0, %v1175
    %v1177 = vpop.f32.mrb[0].mxu0
    %1178 = vmatprep.mubr.f32.mxu0 0.0
    %1179 = vmatmul.mubr.f32.gmra.mrb[0].mxu0 %v764
    %v1180 = vpop.f32.mrb[0].mxu0
    %v1181 = vadd.f32 0.0, %v1180
    %v1182 = vpop.f32.mrb[0].mxu0
    %1183 = vmatprep.mubr.f32.mxu0 0.0
    %1184 = vmatmul.mubr.f32.gmra.mrb[0].mxu0 %v766
    %v1185 = vpop.f32.mrb[0].mxu0
    %v1186 = vadd.f32 0.0, %v1185
    %v1187 = vpop.f32.mrb[0].mxu0
    %1188 = vmatprep.mubr.f32.mxu0 0.0
    %1189 = vmatmul.mubr.f32.gmra.mrb[0].mxu0 %v768
    %v1190 = vpop.f32.mrb[0].mxu0
    %v1191 = vadd.f32 0.0, %v1190
    %v1192 = vpop.f32.mrb[0].mxu0
    %1193 = vmatprep.mubr.f32.mxu0 0.0
    %1194 = vmatmul.mubr.f32.gmra.mrb[0].mxu0 %v770
    %v1195 = vpop.f32.mrb[0].mxu0
    %v1196 = vadd.f32 0.0, %v1195
    %v1197 = vpop.f32.mrb[0].mxu0
    %1198 = vmatprep.mubr.f32.mxu0 0.0
    %1199 = vmatmul.mubr.f32.gmra.mrb[0].mxu0 %v772
    %v1200 = vpop.f32.mrb[0].mxu0
    %v1201 = vadd.f32 0.0, %v1200
    %v1202 = vpop.f32.mrb[0].mxu0
    %1203 = vmatprep.mubr.f32.mxu0 0.0
    %1204 = vmatmul.mubr.f32.gmra.mrb[0].mxu0 %v774
    %v1205 = vpop.f32.mrb[0].mxu0
    %v1206 = vadd.f32 0.0, %v1205
    %v1207 = vpop.f32.mrb[0].mxu0
    %1208 = vmatprep.mubr.f32.mxu0 0.0
    %1209 = vmatmul.mubr.f32.gmra.mrb[0].mxu0 %v776
    %v1210 = vpop.f32.mrb[0].mxu0
    %v1211 = vadd.f32 0.0, %v1210
    %v1212 = vpop.f32.mrb[0].mxu0
    %1213 = vmatprep.mubr.f32.mxu0 0.0
    %1214 = vmatmul.mubr.f32.gmra.mrb[0].mxu0 %v778
    %v1215 = vpop.f32.mrb[0].mxu0
    %v1216 = vadd.f32 0.0, %v1215
    %v1217 = vpop.f32.mrb[0].mxu0
    %1218 = vmatprep.mubr.f32.mxu0 0.0
    %1219 = vmatmul.mubr.f32.gmra.mrb[0].mxu0 %v780
    %v1220 = vpop.f32.mrb[0].mxu0
    %v1221 = vadd.f32 0.0, %v1220
    %v1222 = vpop.f32.mrb[0].mxu0
    %1223 = vmatprep.mubr.f32.mxu0 0.0
    %1224 = vmatmul.mubr.f32.gmra.mrb[0].mxu0 %v782
    %v1225 = vpop.f32.mrb[0].mxu0
    %v1226 = vadd.f32 0.0, %v1225
    %v1227 = vpop.f32.mrb[0].mxu0
    %1228 = vmatprep.mubr.f32.mxu0 0.0
    %1229 = vmatmul.mubr.f32.gmra.mrb[0].mxu0 %v784
    %v1230 = vpop.f32.mrb[0].mxu0
    %v1231 = vadd.f32 0.0, %v1230
    %v1232 = vpop.f32.mrb[0].mxu0
    %1233 = vmatprep.mubr.f32.mxu0 0.0
    %1234 = vmatmul.mubr.f32.gmra.mrb[0].mxu0 %v786
    %v1235 = vpop.f32.mrb[0].mxu0
    %v1236 = vadd.f32 0.0, %v1235
    %v1237 = vpop.f32.mrb[0].mxu0
    %1238 = vmatprep.mubr.f32.mxu0 0.0
    %1239 = vmatmul.mubr.f32.gmra.mrb[0].mxu0 %v788
    %v1240 = vpop.f32.mrb[0].mxu0
    %v1241 = vadd.f32 0.0, %v1240
    %v1242 = vpop.f32.mrb[0].mxu0
    %1243 = vmatprep.mubr.f32.mxu0 0.0
    %1244 = vmatmul.mubr.f32.gmra.mrb[0].mxu0 %v790
    %v1245 = vpop.f32.mrb[0].mxu0
    %v1246 = vadd.f32 0.0, %v1245
    %v1247 = vpop.f32.mrb[0].mxu0
    %1248 = vmatprep.mubr.f32.mxu0 0.0
    %1249 = vmatmul.mubr.f32.gmra.mrb[0].mxu0 %v792
    %v1250 = vpop.f32.mrb[0].mxu0
    %v1251 = vadd.f32 0.0, %v1250
    %v1252 = vpop.f32.mrb[0].mxu0
    %1253 = vmatprep.mubr.f32.mxu0 0.0
    %1254 = vmatmul.mubr.f32.gmra.mrb[0].mxu0 %v794
    %v1255 = vpop.f32.mrb[0].mxu0
    %v1256 = vadd.f32 0.0, %v1255
    %v1257 = vpop.f32.mrb[0].mxu0
    %1258 = vmatprep.mubr.f32.mxu0 0.0
    %1259 = vmatmul.mubr.f32.gmra.mrb[0].mxu0 %v796
    %v1260 = vpop.f32.mrb[0].mxu0
    %v1261 = vadd.f32 0.0, %v1260
    %v1262 = vpop.f32.mrb[0].mxu0
    %1263 = vmatprep.mubr.f32.mxu0 0.0
    %1264 = vmatmul.mubr.f32.gmra.mrb[0].mxu0 %v798
    %v1265 = vpop.f32.mrb[0].mxu0
    %v1266 = vadd.f32 0.0, %v1265
    %v1267 = vpop.f32.mrb[0].mxu0
    %1268 = vmatprep.mubr.f32.mxu0 0.0
    %1269 = vmatmul.mubr.f32.gmra.mrb[0].mxu0 %v800
    %v1270 = vpop.f32.mrb[0].mxu0
    %v1271 = vadd.f32 0.0, %v1270
    %v1272 = vpop.f32.mrb[0].mxu0
    %1273 = vmatprep.mubr.f32.mxu0 0.0
    %1274 = vmatmul.mubr.f32.gmra.mrb[0].mxu0 %v802
    %v1275 = vpop.f32.mrb[0].mxu0
    %v1276 = vadd.f32 0.0, %v1275
    %v1277 = vpop.f32.mrb[0].mxu0
    %1278 = vmatprep.mubr.f32.mxu0 0.0
    %1279 = vmatmul.mubr.f32.gmra.mrb[0].mxu0 %v804
    %v1280 = vpop.f32.mrb[0].mxu0
    %v1281 = vadd.f32 0.0, %v1280
    %v1282 = vpop.f32.mrb[0].mxu0
    %1283 = vmatprep.mubr.f32.mxu0 0.0
    %1284 = vmatmul.mubr.f32.gmra.mrb[0].mxu0 %v806
    %v1285 = vpop.f32.mrb[0].mxu0
    %v1286 = vadd.f32 0.0, %v1285
    %v1287 = vpop.f32.mrb[0].mxu0
    %1288 = vdwg.mxu0
    %v1289 = vld [vmem:[%s1] sm:$0xf]
    %v1290 = vld [vmem:[%s1 + $0x4] sm:$0xf]
    %v1291 = vld [vmem:[%s1 + $0x8] sm:$0xf]
    %v1292 = vld [vmem:[%s1 + $0xc] sm:$0xf]
    %v1293 = vld [vmem:[%s1 + $0x10] sm:$0xf]
    %v1294 = vld [vmem:[%s1 + $0x14] sm:$0xf]
    %v1295 = vld [vmem:[%s1 + $0x18] sm:$0xf]
    %v1296 = vld [vmem:[%s1 + $0x1c] sm:$0xf]
    %v1297 = vld [vmem:[%s1 + $0x20] sm:$0xf]
    %v1298 = vld [vmem:[%s1 + $0x24] sm:$0xf]
    %v1299 = vld [vmem:[%s1 + $0x28] sm:$0xf]
    %v1300 = vld [vmem:[%s1 + $0x2c] sm:$0xf]
    %v1301 = vld [vmem:[%s1 + $0x30] sm:$0xf]
    %v1302 = vld [vmem:[%s1 + $0x34] sm:$0xf]
    %v1303 = vld [vmem:[%s1 + $0x38] sm:$0xf]
    %v1304 = vld [vmem:[%s1 + $0x3c] sm:$0xf]
    %v1305 = vld [vmem:[%s1 + $0x40] sm:$0xf]
    %v1306 = vld [vmem:[%s1 + $0x44] sm:$0xf]
    %v1307 = vld [vmem:[%s1 + $0x48] sm:$0xf]
    %v1308 = vld [vmem:[%s1 + $0x4c] sm:$0xf]
    %v1309 = vld [vmem:[%s1 + $0x50] sm:$0xf]
    %v1310 = vld [vmem:[%s1 + $0x54] sm:$0xf]
    %v1311 = vld [vmem:[%s1 + $0x58] sm:$0xf]
    %v1312 = vld [vmem:[%s1 + $0x5c] sm:$0xf]
    %v1313 = vld [vmem:[%s1 + $0x60] sm:$0xf]
    %v1314 = vld [vmem:[%s1 + $0x64] sm:$0xf]
    %v1315 = vld [vmem:[%s1 + $0x68] sm:$0xf]
    %v1316 = vld [vmem:[%s1 + $0x6c] sm:$0xf]
    %v1317 = vld [vmem:[%s1 + $0x70] sm:$0xf]
    %v1318 = vld [vmem:[%s1 + $0x74] sm:$0xf]
    %v1319 = vld [vmem:[%s1 + $0x78] sm:$0xf]
    %v1320 = vld [vmem:[%s1 + $0x7c] sm:$0xf]
    %v1321 = vld [vmem:[#allocation2] sm:$0xf]
    %v1322 = vld [vmem:[#allocation2 + $0x4] sm:$0xf]
    %v1323 = vld [vmem:[#allocation2 + $0x8] sm:$0xf]
    %v1324 = vld [vmem:[#allocation2 + $0xc] sm:$0xf]
    %v1325 = vld [vmem:[#allocation2 + $0x10] sm:$0xf]
    %v1326 = vld [vmem:[#allocation2 + $0x14] sm:$0xf]
    %v1327 = vld [vmem:[#allocation2 + $0x18] sm:$0xf]
    %v1328 = vld [vmem:[#allocation2 + $0x1c] sm:$0xf]
    %v1329 = vld [vmem:[#allocation2 + $0x20] sm:$0xf]
    %v1330 = vld [vmem:[#allocation2 + $0x24] sm:$0xf]
    %v1331 = vld [vmem:[#allocation2 + $0x28] sm:$0xf]
    %v1332 = vld [vmem:[#allocation2 + $0x2c] sm:$0xf]
    %v1333 = vld [vmem:[#allocation2 + $0x30] sm:$0xf]
    %v1334 = vld [vmem:[#allocation2 + $0x34] sm:$0xf]
    %v1335 = vld [vmem:[#allocation2 + $0x38] sm:$0xf]
    %v1336 = vld [vmem:[#allocation2 + $0x3c] sm:$0xf]
    %v1337 = vld [vmem:[%s6] sm:$0x1]
    %v1339 = vlaneseq
    %v1340 = vshrl.u32 %v1339, 7
    %v1341 = vsub.s32 0, %v1340
    %v1342 = vrot.slane %v1337, %v1341
    %v1376 = vunpack.c.l.b16 %v1289
    %v1377 = vunpack.c.l.b16 %v1290
    %v1378 = vunpack.c.l.b16 %v1291
    %v1379 = vunpack.c.l.b16 %v1292
    %v1380 = vunpack.c.l.b16 %v1293
    %v1381 = vunpack.c.l.b16 %v1294
    %v1382 = vunpack.c.l.b16 %v1295
    %v1383 = vunpack.c.l.b16 %v1296
    %v1384 = vunpack.c.l.b16 %v1297
    %v1385 = vunpack.c.l.b16 %v1298
    %v1386 = vunpack.c.l.b16 %v1299
    %v1387 = vunpack.c.l.b16 %v1300
    %v1388 = vunpack.c.l.b16 %v1301
    %v1389 = vunpack.c.l.b16 %v1302
    %v1390 = vunpack.c.l.b16 %v1303
    %v1391 = vunpack.c.l.b16 %v1304
    %v1392 = vunpack.c.l.b16 %v1305
    %v1393 = vunpack.c.l.b16 %v1306
    %v1394 = vunpack.c.l.b16 %v1307
    %v1395 = vunpack.c.l.b16 %v1308
    %v1396 = vunpack.c.l.b16 %v1309
    %v1397 = vunpack.c.l.b16 %v1310
    %v1398 = vunpack.c.l.b16 %v1311
    %v1399 = vunpack.c.l.b16 %v1312
    %v1400 = vunpack.c.l.b16 %v1313
    %v1401 = vunpack.c.l.b16 %v1314
    %v1402 = vunpack.c.l.b16 %v1315
    %v1403 = vunpack.c.l.b16 %v1316
    %v1404 = vunpack.c.l.b16 %v1317
    %v1405 = vunpack.c.l.b16 %v1318
    %v1406 = vunpack.c.l.b16 %v1319
    %v1407 = vunpack.c.l.b16 %v1320
    %v1408 = vpack.c.b16 %v1377, %v1376
    %v1409 = vpack.c.b16 %v1379, %v1378
    %v1410 = vpack.c.b16 %v1381, %v1380
    %v1411 = vpack.c.b16 %v1383, %v1382
    %v1412 = vpack.c.b16 %v1385, %v1384
    %v1413 = vpack.c.b16 %v1387, %v1386
    %v1414 = vpack.c.b16 %v1389, %v1388
    %v1415 = vpack.c.b16 %v1391, %v1390
    %v1416 = vpack.c.b16 %v1393, %v1392
    %v1417 = vpack.c.b16 %v1395, %v1394
    %v1418 = vpack.c.b16 %v1397, %v1396
    %v1419 = vpack.c.b16 %v1399, %v1398
    %v1420 = vpack.c.b16 %v1401, %v1400
    %v1421 = vpack.c.b16 %v1403, %v1402
    %v1422 = vpack.c.b16 %v1405, %v1404
    %v1423 = vpack.c.b16 %v1407, %v1406
    %v1456 = vunpack.c.l.b16 %v1321
    %v1457 = vunpack.c.l.b16 %v1322
    %v1458 = vunpack.c.l.b16 %v1323
    %v1459 = vunpack.c.l.b16 %v1324
    %v1460 = vunpack.c.l.b16 %v1325
    %v1461 = vunpack.c.l.b16 %v1326
    %v1462 = vunpack.c.l.b16 %v1327
    %v1463 = vunpack.c.l.b16 %v1328
    %v1464 = vunpack.c.l.b16 %v1329
    %v1465 = vunpack.c.l.b16 %v1330
    %v1466 = vunpack.c.l.b16 %v1331
    %v1467 = vunpack.c.l.b16 %v1332
    %v1468 = vunpack.c.l.b16 %v1333
    %v1469 = vunpack.c.l.b16 %v1334
    %v1470 = vunpack.c.l.b16 %v1335
    %v1471 = vunpack.c.l.b16 %v1336
    %v1472 = vpack.c.b16 %v1457, %v1456
    %v1473 = vpack.c.b16 %v1459, %v1458
    %v1474 = vpack.c.b16 %v1461, %v1460
    %v1475 = vpack.c.b16 %v1463, %v1462
    %v1476 = vpack.c.b16 %v1465, %v1464
    %v1477 = vpack.c.b16 %v1467, %v1466
    %v1478 = vpack.c.b16 %v1469, %v1468
    %v1479 = vpack.c.b16 %v1471, %v1470
    %1488 = vmatprep.subr.bf16.mxu0 0
    %1489 = vmatpush1.bf16.msra.mxu0 %v1472
    %1490 = vmatprep.subr.bf16.mxu0 0
    %1491 = vmatpush1.bf16.msra.mxu0 %v1473
    %1492 = vmatprep.subr.bf16.mxu0 0
    %1493 = vmatpush1.bf16.msra.mxu0 %v1474
    %1494 = vmatprep.subr.bf16.mxu0 0
    %1495 = vmatpush1.bf16.msra.mxu0 %v1475
    %1496 = vmatprep.subr.bf16.mxu0 0
    %1497 = vmatpush1.bf16.msra.mxu0 %v1476
    %1498 = vmatprep.subr.bf16.mxu0 0
    %1499 = vmatpush1.bf16.msra.mxu0 %v1477
    %1500 = vmatprep.subr.bf16.mxu0 0
    %1501 = vmatpush1.bf16.msra.mxu0 %v1478
    %1502 = vmatprep.subr.bf16.mxu0 0
    %1503 = vmatpush1.bf16.msra.mxu0 %v1479
    %1504 = vmatprep.subr.bf16.mxu0 0
    %1505 = vmatpush1.bf16.msra.mxu0 0
    %1506 = vmatprep.subr.bf16.mxu0 0
    %1507 = vmatpush1.bf16.msra.mxu0 0
    %1508 = vmatprep.subr.bf16.mxu0 0
    %1509 = vmatpush1.bf16.msra.mxu0 0
    %1510 = vmatprep.subr.bf16.mxu0 0
    %1511 = vmatpush1.bf16.msra.mxu0 0
    %1512 = vmatprep.subr.bf16.mxu0 0
    %1513 = vmatpush1.bf16.msra.mxu0 0
    %1514 = vmatprep.subr.bf16.mxu0 0
    %1515 = vmatpush1.bf16.msra.mxu0 0
    %1516 = vmatprep.subr.bf16.mxu0 0
    %1517 = vmatpush1.bf16.msra.mxu0 0
    %1518 = vmatprep.subr.bf16.mxu0 0
    %1519 = vmatpush1.bf16.msra.mxu0 0
    %1520 = vmatprep.mubr.bf16.mxu0 0
    %1521 = vmatmul.mubr.bf16.gmra.mrb[0].mxu0 %v1408
    %v1522 = vpop.f32.mrb[0].mxu0
    %v1523 = vadd.f32 %v1342, %v1522
    %v1524 = vpop.f32.mrb[0].mxu0
    %v1525 = vpop.f32.mrb[0].mxu0
    %v1526 = vadd.f32 %v1342, %v1525
    %v1527 = vpop.f32.mrb[0].mxu0
    %1528 = vmatprep.mubr.bf16.mxu0 0
    %1529 = vmatmul.mubr.bf16.gmra.mrb[0].mxu0 %v1409
    %v1530 = vpop.f32.mrb[0].mxu0
    %v1531 = vadd.f32 %v1342, %v1530
    %v1532 = vpop.f32.mrb[0].mxu0
    %v1533 = vpop.f32.mrb[0].mxu0
    %v1534 = vadd.f32 %v1342, %v1533
    %v1535 = vpop.f32.mrb[0].mxu0
    %1536 = vmatprep.mubr.bf16.mxu0 0
    %1537 = vmatmul.mubr.bf16.gmra.mrb[0].mxu0 %v1410
    %v1538 = vpop.f32.mrb[0].mxu0
    %v1539 = vadd.f32 %v1342, %v1538
    %v1540 = vpop.f32.mrb[0].mxu0
    %v1541 = vpop.f32.mrb[0].mxu0
    %v1542 = vadd.f32 %v1342, %v1541
    %v1543 = vpop.f32.mrb[0].mxu0
    %1544 = vmatprep.mubr.bf16.mxu0 0
    %1545 = vmatmul.mubr.bf16.gmra.mrb[0].mxu0 %v1411
    %v1546 = vpop.f32.mrb[0].mxu0
    %v1547 = vadd.f32 %v1342, %v1546
    %v1548 = vpop.f32.mrb[0].mxu0
    %v1549 = vpop.f32.mrb[0].mxu0
    %v1550 = vadd.f32 %v1342, %v1549
    %v1551 = vpop.f32.mrb[0].mxu0
    %1552 = vmatprep.mubr.bf16.mxu0 0
    %1553 = vmatmul.mubr.bf16.gmra.mrb[0].mxu0 %v1412
    %v1554 = vpop.f32.mrb[0].mxu0
    %v1555 = vadd.f32 %v1342, %v1554
    %v1556 = vpop.f32.mrb[0].mxu0
    %v1557 = vpop.f32.mrb[0].mxu0
    %v1558 = vadd.f32 %v1342, %v1557
    %v1559 = vpop.f32.mrb[0].mxu0
    %1560 = vmatprep.mubr.bf16.mxu0 0
    %1561 = vmatmul.mubr.bf16.gmra.mrb[0].mxu0 %v1413
    %v1562 = vpop.f32.mrb[0].mxu0
    %v1563 = vadd.f32 %v1342, %v1562
    %v1564 = vpop.f32.mrb[0].mxu0
    %v1565 = vpop.f32.mrb[0].mxu0
    %v1566 = vadd.f32 %v1342, %v1565
    %v1567 = vpop.f32.mrb[0].mxu0
    %1568 = vmatprep.mubr.bf16.mxu0 0
    %1569 = vmatmul.mubr.bf16.gmra.mrb[0].mxu0 %v1414
    %v1570 = vpop.f32.mrb[0].mxu0
    %v1571 = vadd.f32 %v1342, %v1570
    %v1572 = vpop.f32.mrb[0].mxu0
    %v1573 = vpop.f32.mrb[0].mxu0
    %v1574 = vadd.f32 %v1342, %v1573
    %v1575 = vpop.f32.mrb[0].mxu0
    %1576 = vmatprep.mubr.bf16.mxu0 0
    %1577 = vmatmul.mubr.bf16.gmra.mrb[0].mxu0 %v1415
    %v1578 = vpop.f32.mrb[0].mxu0
    %v1579 = vadd.f32 %v1342, %v1578
    %v1580 = vpop.f32.mrb[0].mxu0
    %v1581 = vpop.f32.mrb[0].mxu0
    %v1582 = vadd.f32 %v1342, %v1581
    %v1583 = vpop.f32.mrb[0].mxu0
    %1584 = vmatprep.mubr.bf16.mxu0 0
    %1585 = vmatmul.mubr.bf16.gmra.mrb[0].mxu0 %v1416
    %v1586 = vpop.f32.mrb[0].mxu0
    %v1587 = vadd.f32 %v1342, %v1586
    %v1588 = vpop.f32.mrb[0].mxu0
    %v1589 = vpop.f32.mrb[0].mxu0
    %v1590 = vadd.f32 %v1342, %v1589
    %v1591 = vpop.f32.mrb[0].mxu0
    %1592 = vmatprep.mubr.bf16.mxu0 0
    %1593 = vmatmul.mubr.bf16.gmra.mrb[0].mxu0 %v1417
    %v1594 = vpop.f32.mrb[0].mxu0
    %v1595 = vadd.f32 %v1342, %v1594
    %v1596 = vpop.f32.mrb[0].mxu0
    %v1597 = vpop.f32.mrb[0].mxu0
    %v1598 = vadd.f32 %v1342, %v1597
    %v1599 = vpop.f32.mrb[0].mxu0
    %1600 = vmatprep.mubr.bf16.mxu0 0
    %1601 = vmatmul.mubr.bf16.gmra.mrb[0].mxu0 %v1418
    %v1602 = vpop.f32.mrb[0].mxu0
    %v1603 = vadd.f32 %v1342, %v1602
    %v1604 = vpop.f32.mrb[0].mxu0
    %v1605 = vpop.f32.mrb[0].mxu0
    %v1606 = vadd.f32 %v1342, %v1605
    %v1607 = vpop.f32.mrb[0].mxu0
    %1608 = vmatprep.mubr.bf16.mxu0 0
    %1609 = vmatmul.mubr.bf16.gmra.mrb[0].mxu0 %v1419
    %v1610 = vpop.f32.mrb[0].mxu0
    %v1611 = vadd.f32 %v1342, %v1610
    %v1612 = vpop.f32.mrb[0].mxu0
    %v1613 = vpop.f32.mrb[0].mxu0
    %v1614 = vadd.f32 %v1342, %v1613
    %v1615 = vpop.f32.mrb[0].mxu0
    %1616 = vmatprep.mubr.bf16.mxu0 0
    %1617 = vmatmul.mubr.bf16.gmra.mrb[0].mxu0 %v1420
    %v1618 = vpop.f32.mrb[0].mxu0
    %v1619 = vadd.f32 %v1342, %v1618
    %v1620 = vpop.f32.mrb[0].mxu0
    %v1621 = vpop.f32.mrb[0].mxu0
    %v1622 = vadd.f32 %v1342, %v1621
    %v1623 = vpop.f32.mrb[0].mxu0
    %1624 = vmatprep.mubr.bf16.mxu0 0
    %1625 = vmatmul.mubr.bf16.gmra.mrb[0].mxu0 %v1421
    %v1626 = vpop.f32.mrb[0].mxu0
    %v1627 = vadd.f32 %v1342, %v1626
    %v1628 = vpop.f32.mrb[0].mxu0
    %v1629 = vpop.f32.mrb[0].mxu0
    %v1630 = vadd.f32 %v1342, %v1629
    %v1631 = vpop.f32.mrb[0].mxu0
    %1632 = vmatprep.mubr.bf16.mxu0 0
    %1633 = vmatmul.mubr.bf16.gmra.mrb[0].mxu0 %v1422
    %v1634 = vpop.f32.mrb[0].mxu0
    %v1635 = vadd.f32 %v1342, %v1634
    %v1636 = vpop.f32.mrb[0].mxu0
    %v1637 = vpop.f32.mrb[0].mxu0
    %v1638 = vadd.f32 %v1342, %v1637
    %v1639 = vpop.f32.mrb[0].mxu0
    %1640 = vmatprep.mubr.bf16.mxu0 0
    %1641 = vmatmul.mubr.bf16.gmra.mrb[0].mxu0 %v1423
    %v1642 = vpop.f32.mrb[0].mxu0
    %v1643 = vadd.f32 %v1342, %v1642
    %v1644 = vpop.f32.mrb[0].mxu0
    %v1645 = vpop.f32.mrb[0].mxu0
    %v1646 = vadd.f32 %v1342, %v1645
    %v1647 = vpop.f32.mrb[0].mxu0
    %1648 = vdwg.mxu0
    %v1649 = vmax.f32 %v1523, 0.0
    %v1650 = vmax.f32 %v1526, 0.0
    %v1651 = vmax.f32 %v1531, 0.0
    %v1652 = vmax.f32 %v1534, 0.0
    %v1653 = vmax.f32 %v1539, 0.0
    %v1654 = vmax.f32 %v1542, 0.0
    %v1655 = vmax.f32 %v1547, 0.0
    %v1656 = vmax.f32 %v1550, 0.0
    %v1657 = vmax.f32 %v1555, 0.0
    %v1658 = vmax.f32 %v1558, 0.0
    %v1659 = vmax.f32 %v1563, 0.0
    %v1660 = vmax.f32 %v1566, 0.0
    %v1661 = vmax.f32 %v1571, 0.0
    %v1662 = vmax.f32 %v1574, 0.0
    %v1663 = vmax.f32 %v1579, 0.0
    %v1664 = vmax.f32 %v1582, 0.0
    %v1665 = vmax.f32 %v1587, 0.0
    %v1666 = vmax.f32 %v1590, 0.0
    %v1667 = vmax.f32 %v1595, 0.0
    %v1668 = vmax.f32 %v1598, 0.0
    %v1669 = vmax.f32 %v1603, 0.0
    %v1670 = vmax.f32 %v1606, 0.0
    %v1671 = vmax.f32 %v1611, 0.0
    %v1672 = vmax.f32 %v1614, 0.0
    %v1673 = vmax.f32 %v1619, 0.0
    %v1674 = vmax.f32 %v1622, 0.0
    %v1675 = vmax.f32 %v1627, 0.0
    %v1676 = vmax.f32 %v1630, 0.0
    %v1677 = vmax.f32 %v1635, 0.0
    %v1678 = vmax.f32 %v1638, 0.0
    %v1679 = vmax.f32 %v1643, 0.0
    %v1680 = vmax.f32 %v1646, 0.0
    %v1681 = vpack.c.bf16 %v1650, %v1649
    %v1682 = vpack.c.bf16 %v1652, %v1651
    %v1683 = vpack.c.bf16 %v1654, %v1653
    %v1684 = vpack.c.bf16 %v1656, %v1655
    %v1685 = vpack.c.bf16 %v1658, %v1657
    %v1686 = vpack.c.bf16 %v1660, %v1659
    %v1687 = vpack.c.bf16 %v1662, %v1661
    %v1688 = vpack.c.bf16 %v1664, %v1663
    %v1689 = vpack.c.bf16 %v1666, %v1665
    %v1690 = vpack.c.bf16 %v1668, %v1667
    %v1691 = vpack.c.bf16 %v1670, %v1669
    %v1692 = vpack.c.bf16 %v1672, %v1671
    %v1693 = vpack.c.bf16 %v1674, %v1673
    %v1694 = vpack.c.bf16 %v1676, %v1675
    %v1695 = vpack.c.bf16 %v1678, %v1677
    %v1696 = vpack.c.bf16 %v1680, %v1679
    %v1697 = vld [vmem:[%s7] sm:$0xf]
    %v1698 = vld [vmem:[%s7 + $0x4] sm:$0xf]
    %v1699 = vld [vmem:[%s7 + $0x8] sm:$0xf]
    %v1700 = vld [vmem:[%s7 + $0xc] sm:$0xf]
    %v1701 = vld [vmem:[%s7 + $0x10] sm:$0xf]
    %v1702 = vld [vmem:[%s7 + $0x14] sm:$0xf]
    %v1703 = vld [vmem:[%s7 + $0x18] sm:$0xf]
    %v1704 = vld [vmem:[%s7 + $0x1c] sm:$0xf]
    %v1705 = vld [vmem:[%s7 + $0x20] sm:$0xf]
    %v1706 = vld [vmem:[%s7 + $0x24] sm:$0xf]
    %v1707 = vld [vmem:[%s7 + $0x28] sm:$0xf]
    %v1708 = vld [vmem:[%s7 + $0x2c] sm:$0xf]
    %v1709 = vld [vmem:[%s7 + $0x30] sm:$0xf]
    %v1710 = vld [vmem:[%s7 + $0x34] sm:$0xf]
    %v1711 = vld [vmem:[%s7 + $0x38] sm:$0xf]
    %v1712 = vld [vmem:[%s7 + $0x3c] sm:$0xf]
    %v1713 = vld [vmem:[%s8] sm:$0x1]
    %v1715 = vlaneseq
    %v1716 = vshrl.u32 %v1715, 7
    %v1717 = vsub.s32 0, %v1716
    %v1718 = vrot.slane %v1713, %v1717
    %v1736 = vunpack.c.l.b16 %v1697
    %v1737 = vunpack.c.l.b16 %v1698
    %v1738 = vunpack.c.l.b16 %v1699
    %v1739 = vunpack.c.l.b16 %v1700
    %v1740 = vunpack.c.l.b16 %v1701
    %v1741 = vunpack.c.l.b16 %v1702
    %v1742 = vunpack.c.l.b16 %v1703
    %v1743 = vunpack.c.l.b16 %v1704
    %v1744 = vunpack.c.l.b16 %v1705
    %v1745 = vunpack.c.l.b16 %v1706
    %v1746 = vunpack.c.l.b16 %v1707
    %v1747 = vunpack.c.l.b16 %v1708
    %v1748 = vunpack.c.l.b16 %v1709
    %v1749 = vunpack.c.l.b16 %v1710
    %v1750 = vunpack.c.l.b16 %v1711
    %v1751 = vunpack.c.l.b16 %v1712
    %v1752 = vpack.c.b16 %v1737, %v1736
    %v1753 = vpack.c.b16 %v1739, %v1738
    %v1754 = vpack.c.b16 %v1741, %v1740
    %v1755 = vpack.c.b16 %v1743, %v1742
    %v1756 = vpack.c.b16 %v1745, %v1744
    %v1757 = vpack.c.b16 %v1747, %v1746
    %v1758 = vpack.c.b16 %v1749, %v1748
    %v1759 = vpack.c.b16 %v1751, %v1750
    %1768 = vmatprep.subr.bf16.mxu0 0
    %1769 = vmatpush1.bf16.msra.mxu0 %v1752
    %1770 = vmatprep.subr.bf16.mxu0 0
    %1771 = vmatpush1.bf16.msra.mxu0 %v1753
    %1772 = vmatprep.subr.bf16.mxu0 0
    %1773 = vmatpush1.bf16.msra.mxu0 %v1754
    %1774 = vmatprep.subr.bf16.mxu0 0
    %1775 = vmatpush1.bf16.msra.mxu0 %v1755
    %1776 = vmatprep.subr.bf16.mxu0 0
    %1777 = vmatpush1.bf16.msra.mxu0 %v1756
    %1778 = vmatprep.subr.bf16.mxu0 0
    %1779 = vmatpush1.bf16.msra.mxu0 %v1757
    %1780 = vmatprep.subr.bf16.mxu0 0
    %1781 = vmatpush1.bf16.msra.mxu0 %v1758
    %1782 = vmatprep.subr.bf16.mxu0 0
    %1783 = vmatpush1.bf16.msra.mxu0 %v1759
    %1784 = vmatprep.subr.bf16.mxu0 0
    %1785 = vmatpush1.bf16.msra.mxu0 0
    %1786 = vmatprep.subr.bf16.mxu0 0
    %1787 = vmatpush1.bf16.msra.mxu0 0
    %1788 = vmatprep.subr.bf16.mxu0 0
    %1789 = vmatpush1.bf16.msra.mxu0 0
    %1790 = vmatprep.subr.bf16.mxu0 0
    %1791 = vmatpush1.bf16.msra.mxu0 0
    %1792 = vmatprep.subr.bf16.mxu0 0
    %1793 = vmatpush1.bf16.msra.mxu0 0
    %1794 = vmatprep.subr.bf16.mxu0 0
    %1795 = vmatpush1.bf16.msra.mxu0 0
    %1796 = vmatprep.subr.bf16.mxu0 0
    %1797 = vmatpush1.bf16.msra.mxu0 0
    %1798 = vmatprep.subr.bf16.mxu0 0
    %1799 = vmatpush1.bf16.msra.mxu0 0
    %1800 = vmatprep.mubr.bf16.mxu0 0
    %1801 = vmatmul.mubr.bf16.gmra.mrb[0].mxu0 %v1681
    %v1802 = vpop.f32.mrb[0].mxu0
    %v1803 = vadd.f32 %v1718, %v1802
    %v1804 = vpop.f32.mrb[0].mxu0
    %v1805 = vpop.f32.mrb[0].mxu0
    %v1806 = vadd.f32 %v1718, %v1805
    %v1807 = vpop.f32.mrb[0].mxu0
    %1808 = vmatprep.mubr.bf16.mxu0 0
    %1809 = vmatmul.mubr.bf16.gmra.mrb[0].mxu0 %v1682
    %v1810 = vpop.f32.mrb[0].mxu0
    %v1811 = vadd.f32 %v1718, %v1810
    %v1812 = vpop.f32.mrb[0].mxu0
    %v1813 = vpop.f32.mrb[0].mxu0
    %v1814 = vadd.f32 %v1718, %v1813
    %v1815 = vpop.f32.mrb[0].mxu0
    %1816 = vmatprep.mubr.bf16.mxu0 0
    %1817 = vmatmul.mubr.bf16.gmra.mrb[0].mxu0 %v1683
    %v1818 = vpop.f32.mrb[0].mxu0
    %v1819 = vadd.f32 %v1718, %v1818
    %v1820 = vpop.f32.mrb[0].mxu0
    %v1821 = vpop.f32.mrb[0].mxu0
    %v1822 = vadd.f32 %v1718, %v1821
    %v1823 = vpop.f32.mrb[0].mxu0
    %1824 = vmatprep.mubr.bf16.mxu0 0
    %1825 = vmatmul.mubr.bf16.gmra.mrb[0].mxu0 %v1684
    %v1826 = vpop.f32.mrb[0].mxu0
    %v1827 = vadd.f32 %v1718, %v1826
    %v1828 = vpop.f32.mrb[0].mxu0
    %v1829 = vpop.f32.mrb[0].mxu0
    %v1830 = vadd.f32 %v1718, %v1829
    %v1831 = vpop.f32.mrb[0].mxu0
    %1832 = vmatprep.mubr.bf16.mxu0 0
    %1833 = vmatmul.mubr.bf16.gmra.mrb[0].mxu0 %v1685
    %v1834 = vpop.f32.mrb[0].mxu0
    %v1835 = vadd.f32 %v1718, %v1834
    %v1836 = vpop.f32.mrb[0].mxu0
    %v1837 = vpop.f32.mrb[0].mxu0
    %v1838 = vadd.f32 %v1718, %v1837
    %v1839 = vpop.f32.mrb[0].mxu0
    %1840 = vmatprep.mubr.bf16.mxu0 0
    %1841 = vmatmul.mubr.bf16.gmra.mrb[0].mxu0 %v1686
    %v1842 = vpop.f32.mrb[0].mxu0
    %v1843 = vadd.f32 %v1718, %v1842
    %v1844 = vpop.f32.mrb[0].mxu0
    %v1845 = vpop.f32.mrb[0].mxu0
    %v1846 = vadd.f32 %v1718, %v1845
    %v1847 = vpop.f32.mrb[0].mxu0
    %1848 = vmatprep.mubr.bf16.mxu0 0
    %1849 = vmatmul.mubr.bf16.gmra.mrb[0].mxu0 %v1687
    %v1850 = vpop.f32.mrb[0].mxu0
    %v1851 = vadd.f32 %v1718, %v1850
    %v1852 = vpop.f32.mrb[0].mxu0
    %v1853 = vpop.f32.mrb[0].mxu0
    %v1854 = vadd.f32 %v1718, %v1853
    %v1855 = vpop.f32.mrb[0].mxu0
    %1856 = vmatprep.mubr.bf16.mxu0 0
    %1857 = vmatmul.mubr.bf16.gmra.mrb[0].mxu0 %v1688
    %v1858 = vpop.f32.mrb[0].mxu0
    %v1859 = vadd.f32 %v1718, %v1858
    %v1860 = vpop.f32.mrb[0].mxu0
    %v1861 = vpop.f32.mrb[0].mxu0
    %v1862 = vadd.f32 %v1718, %v1861
    %v1863 = vpop.f32.mrb[0].mxu0
    %1864 = vmatprep.mubr.bf16.mxu0 0
    %1865 = vmatmul.mubr.bf16.gmra.mrb[0].mxu0 %v1689
    %v1866 = vpop.f32.mrb[0].mxu0
    %v1867 = vadd.f32 %v1718, %v1866
    %v1868 = vpop.f32.mrb[0].mxu0
    %v1869 = vpop.f32.mrb[0].mxu0
    %v1870 = vadd.f32 %v1718, %v1869
    %v1871 = vpop.f32.mrb[0].mxu0
    %1872 = vmatprep.mubr.bf16.mxu0 0
    %1873 = vmatmul.mubr.bf16.gmra.mrb[0].mxu0 %v1690
    %v1874 = vpop.f32.mrb[0].mxu0
    %v1875 = vadd.f32 %v1718, %v1874
    %v1876 = vpop.f32.mrb[0].mxu0
    %v1877 = vpop.f32.mrb[0].mxu0
    %v1878 = vadd.f32 %v1718, %v1877
    %v1879 = vpop.f32.mrb[0].mxu0
    %1880 = vmatprep.mubr.bf16.mxu0 0
    %1881 = vmatmul.mubr.bf16.gmra.mrb[0].mxu0 %v1691
    %v1882 = vpop.f32.mrb[0].mxu0
    %v1883 = vadd.f32 %v1718, %v1882
    %v1884 = vpop.f32.mrb[0].mxu0
    %v1885 = vpop.f32.mrb[0].mxu0
    %v1886 = vadd.f32 %v1718, %v1885
    %v1887 = vpop.f32.mrb[0].mxu0
    %1888 = vmatprep.mubr.bf16.mxu0 0
    %1889 = vmatmul.mubr.bf16.gmra.mrb[0].mxu0 %v1692
    %v1890 = vpop.f32.mrb[0].mxu0
    %v1891 = vadd.f32 %v1718, %v1890
    %v1892 = vpop.f32.mrb[0].mxu0
    %v1893 = vpop.f32.mrb[0].mxu0
    %v1894 = vadd.f32 %v1718, %v1893
    %v1895 = vpop.f32.mrb[0].mxu0
    %1896 = vmatprep.mubr.bf16.mxu0 0
    %1897 = vmatmul.mubr.bf16.gmra.mrb[0].mxu0 %v1693
    %v1898 = vpop.f32.mrb[0].mxu0
    %v1899 = vadd.f32 %v1718, %v1898
    %v1900 = vpop.f32.mrb[0].mxu0
    %v1901 = vpop.f32.mrb[0].mxu0
    %v1902 = vadd.f32 %v1718, %v1901
    %v1903 = vpop.f32.mrb[0].mxu0
    %1904 = vmatprep.mubr.bf16.mxu0 0
    %1905 = vmatmul.mubr.bf16.gmra.mrb[0].mxu0 %v1694
    %v1906 = vpop.f32.mrb[0].mxu0
    %v1907 = vadd.f32 %v1718, %v1906
    %v1908 = vpop.f32.mrb[0].mxu0
    %v1909 = vpop.f32.mrb[0].mxu0
    %v1910 = vadd.f32 %v1718, %v1909
    %v1911 = vpop.f32.mrb[0].mxu0
    %1912 = vmatprep.mubr.bf16.mxu0 0
    %1913 = vmatmul.mubr.bf16.gmra.mrb[0].mxu0 %v1695
    %v1914 = vpop.f32.mrb[0].mxu0
    %v1915 = vadd.f32 %v1718, %v1914
    %v1916 = vpop.f32.mrb[0].mxu0
    %v1917 = vpop.f32.mrb[0].mxu0
    %v1918 = vadd.f32 %v1718, %v1917
    %v1919 = vpop.f32.mrb[0].mxu0
    %1920 = vmatprep.mubr.bf16.mxu0 0
    %1921 = vmatmul.mubr.bf16.gmra.mrb[0].mxu0 %v1696
    %v1922 = vpop.f32.mrb[0].mxu0
    %v1923 = vadd.f32 %v1718, %v1922
    %v1924 = vpop.f32.mrb[0].mxu0
    %v1925 = vpop.f32.mrb[0].mxu0
    %v1926 = vadd.f32 %v1718, %v1925
    %v1927 = vpop.f32.mrb[0].mxu0
    %1928 = vdwg.mxu0
    %v1929 = vmax.f32 %v1803, 0.0
    %v1930 = vmax.f32 %v1806, 0.0
    %v1931 = vmax.f32 %v1811, 0.0
    %v1932 = vmax.f32 %v1814, 0.0
    %v1933 = vmax.f32 %v1819, 0.0
    %v1934 = vmax.f32 %v1822, 0.0
    %v1935 = vmax.f32 %v1827, 0.0
    %v1936 = vmax.f32 %v1830, 0.0
    %v1937 = vmax.f32 %v1835, 0.0
    %v1938 = vmax.f32 %v1838, 0.0
    %v1939 = vmax.f32 %v1843, 0.0
    %v1940 = vmax.f32 %v1846, 0.0
    %v1941 = vmax.f32 %v1851, 0.0
    %v1942 = vmax.f32 %v1854, 0.0
    %v1943 = vmax.f32 %v1859, 0.0
    %v1944 = vmax.f32 %v1862, 0.0
    %v1945 = vmax.f32 %v1867, 0.0
    %v1946 = vmax.f32 %v1870, 0.0
    %v1947 = vmax.f32 %v1875, 0.0
    %v1948 = vmax.f32 %v1878, 0.0
    %v1949 = vmax.f32 %v1883, 0.0
    %v1950 = vmax.f32 %v1886, 0.0
    %v1951 = vmax.f32 %v1891, 0.0
    %v1952 = vmax.f32 %v1894, 0.0
    %v1953 = vmax.f32 %v1899, 0.0
    %v1954 = vmax.f32 %v1902, 0.0
    %v1955 = vmax.f32 %v1907, 0.0
    %v1956 = vmax.f32 %v1910, 0.0
    %v1957 = vmax.f32 %v1915, 0.0
    %v1958 = vmax.f32 %v1918, 0.0
    %v1959 = vmax.f32 %v1923, 0.0
    %v1960 = vmax.f32 %v1926, 0.0
    %v1961 = vpack.c.bf16 %v1930, %v1929
    %v1962 = vpack.c.bf16 %v1932, %v1931
    %v1963 = vpack.c.bf16 %v1934, %v1933
    %v1964 = vpack.c.bf16 %v1936, %v1935
    %v1965 = vpack.c.bf16 %v1938, %v1937
    %v1966 = vpack.c.bf16 %v1940, %v1939
    %v1967 = vpack.c.bf16 %v1942, %v1941
    %v1968 = vpack.c.bf16 %v1944, %v1943
    %v1969 = vpack.c.bf16 %v1946, %v1945
    %v1970 = vpack.c.bf16 %v1948, %v1947
    %v1971 = vpack.c.bf16 %v1950, %v1949
    %v1972 = vpack.c.bf16 %v1952, %v1951
    %v1973 = vpack.c.bf16 %v1954, %v1953
    %v1974 = vpack.c.bf16 %v1956, %v1955
    %v1975 = vpack.c.bf16 %v1958, %v1957
    %v1976 = vpack.c.bf16 %v1960, %v1959
    %v1977 = vld [vmem:[#allocation4] sm:$0xf]
    %v1978 = vld [vmem:[#allocation4 + $0x4] sm:$0xf]
    %v1979 = vld [vmem:[#allocation4 + $0x8] sm:$0xf]
    %v1980 = vld [vmem:[#allocation4 + $0xc] sm:$0xf]
    %v1981 = vld [vmem:[#allocation4 + $0x10] sm:$0xf]
    %v1982 = vld [vmem:[#allocation4 + $0x14] sm:$0xf]
    %v1983 = vld [vmem:[#allocation4 + $0x18] sm:$0xf]
    %v1984 = vld [vmem:[#allocation4 + $0x1c] sm:$0xf]
    %v1985 = vld [vmem:[#allocation4 + $0x20] sm:$0xf]
    %v1986 = vld [vmem:[#allocation4 + $0x24] sm:$0xf]
    %v1987 = vld [vmem:[#allocation4 + $0x28] sm:$0xf]
    %v1988 = vld [vmem:[#allocation4 + $0x2c] sm:$0xf]
    %v1989 = vld [vmem:[#allocation4 + $0x30] sm:$0xf]
    %v1990 = vld [vmem:[#allocation4 + $0x34] sm:$0xf]
    %v1991 = vld [vmem:[#allocation4 + $0x38] sm:$0xf]
    %v1992 = vld [vmem:[#allocation4 + $0x3c] sm:$0xf]
    %v1993 = vld [vmem:[%s10] sm:$0x1]
    %v1995 = vlaneseq
    %v1996 = vshrl.u32 %v1995, 7
    %v1997 = vsub.s32 0, %v1996
    %v1998 = vrot.slane %v1993, %v1997
    %v2016 = vunpack.c.l.b16 %v1977
    %v2017 = vunpack.c.l.b16 %v1978
    %v2018 = vunpack.c.l.b16 %v1979
    %v2019 = vunpack.c.l.b16 %v1980
    %v2020 = vunpack.c.l.b16 %v1981
    %v2021 = vunpack.c.l.b16 %v1982
    %v2022 = vunpack.c.l.b16 %v1983
    %v2023 = vunpack.c.l.b16 %v1984
    %v2024 = vunpack.c.l.b16 %v1985
    %v2025 = vunpack.c.l.b16 %v1986
    %v2026 = vunpack.c.l.b16 %v1987
    %v2027 = vunpack.c.l.b16 %v1988
    %v2028 = vunpack.c.l.b16 %v1989
    %v2029 = vunpack.c.l.b16 %v1990
    %v2030 = vunpack.c.l.b16 %v1991
    %v2031 = vunpack.c.l.b16 %v1992
    %v2032 = vpack.c.b16 %v2017, %v2016
    %v2033 = vpack.c.b16 %v2019, %v2018
    %v2034 = vpack.c.b16 %v2021, %v2020
    %v2035 = vpack.c.b16 %v2023, %v2022
    %v2036 = vpack.c.b16 %v2025, %v2024
    %v2037 = vpack.c.b16 %v2027, %v2026
    %v2038 = vpack.c.b16 %v2029, %v2028
    %v2039 = vpack.c.b16 %v2031, %v2030
    %2048 = vmatprep.subr.bf16.mxu0 0
    %2049 = vmatpush1.bf16.msra.mxu0 %v2032
    %2050 = vmatprep.subr.bf16.mxu0 0
    %2051 = vmatpush1.bf16.msra.mxu0 %v2033
    %2052 = vmatprep.subr.bf16.mxu0 0
    %2053 = vmatpush1.bf16.msra.mxu0 %v2034
    %2054 = vmatprep.subr.bf16.mxu0 0
    %2055 = vmatpush1.bf16.msra.mxu0 %v2035
    %2056 = vmatprep.subr.bf16.mxu0 0
    %2057 = vmatpush1.bf16.msra.mxu0 %v2036
    %2058 = vmatprep.subr.bf16.mxu0 0
    %2059 = vmatpush1.bf16.msra.mxu0 %v2037
    %2060 = vmatprep.subr.bf16.mxu0 0
    %2061 = vmatpush1.bf16.msra.mxu0 %v2038
    %2062 = vmatprep.subr.bf16.mxu0 0
    %2063 = vmatpush1.bf16.msra.mxu0 %v2039
    %2064 = vmatprep.subr.bf16.mxu0 0
    %2065 = vmatpush1.bf16.msra.mxu0 0
    %2066 = vmatprep.subr.bf16.mxu0 0
    %2067 = vmatpush1.bf16.msra.mxu0 0
    %2068 = vmatprep.subr.bf16.mxu0 0
    %2069 = vmatpush1.bf16.msra.mxu0 0
    %2070 = vmatprep.subr.bf16.mxu0 0
    %2071 = vmatpush1.bf16.msra.mxu0 0
    %2072 = vmatprep.subr.bf16.mxu0 0
    %2073 = vmatpush1.bf16.msra.mxu0 0
    %2074 = vmatprep.subr.bf16.mxu0 0
    %2075 = vmatpush1.bf16.msra.mxu0 0
    %2076 = vmatprep.subr.bf16.mxu0 0
    %2077 = vmatpush1.bf16.msra.mxu0 0
    %2078 = vmatprep.subr.bf16.mxu0 0
    %2079 = vmatpush1.bf16.msra.mxu0 0
    %2080 = vmatprep.mubr.bf16.mxu0 0
    %2081 = vmatmul.mubr.bf16.gmra.mrb[0].mxu0 %v1961
    %v2082 = vpop.f32.mrb[0].mxu0
    %v2083 = vadd.f32 %v1998, %v2082
    %v2084 = vpop.f32.mrb[0].mxu0
    %v2085 = vpop.f32.mrb[0].mxu0
    %v2086 = vadd.f32 %v1998, %v2085
    %v2087 = vpop.f32.mrb[0].mxu0
    %2088 = vmatprep.mubr.bf16.mxu0 0
    %2089 = vmatmul.mubr.bf16.gmra.mrb[0].mxu0 %v1962
    %v2090 = vpop.f32.mrb[0].mxu0
    %v2091 = vadd.f32 %v1998, %v2090
    %v2092 = vpop.f32.mrb[0].mxu0
    %v2093 = vpop.f32.mrb[0].mxu0
    %v2094 = vadd.f32 %v1998, %v2093
    %v2095 = vpop.f32.mrb[0].mxu0
    %2096 = vmatprep.mubr.bf16.mxu0 0
    %2097 = vmatmul.mubr.bf16.gmra.mrb[0].mxu0 %v1963
    %v2098 = vpop.f32.mrb[0].mxu0
    %v2099 = vadd.f32 %v1998, %v2098
    %v2100 = vpop.f32.mrb[0].mxu0
    %v2101 = vpop.f32.mrb[0].mxu0
    %v2102 = vadd.f32 %v1998, %v2101
    %v2103 = vpop.f32.mrb[0].mxu0
    %2104 = vmatprep.mubr.bf16.mxu0 0
    %2105 = vmatmul.mubr.bf16.gmra.mrb[0].mxu0 %v1964
    %v2106 = vpop.f32.mrb[0].mxu0
    %v2107 = vadd.f32 %v1998, %v2106
    %v2108 = vpop.f32.mrb[0].mxu0
    %v2109 = vpop.f32.mrb[0].mxu0
    %v2110 = vadd.f32 %v1998, %v2109
    %v2111 = vpop.f32.mrb[0].mxu0
    %2112 = vmatprep.mubr.bf16.mxu0 0
    %2113 = vmatmul.mubr.bf16.gmra.mrb[0].mxu0 %v1965
    %v2114 = vpop.f32.mrb[0].mxu0
    %v2115 = vadd.f32 %v1998, %v2114
    %v2116 = vpop.f32.mrb[0].mxu0
    %v2117 = vpop.f32.mrb[0].mxu0
    %v2118 = vadd.f32 %v1998, %v2117
    %v2119 = vpop.f32.mrb[0].mxu0
    %2120 = vmatprep.mubr.bf16.mxu0 0
    %2121 = vmatmul.mubr.bf16.gmra.mrb[0].mxu0 %v1966
    %v2122 = vpop.f32.mrb[0].mxu0
    %v2123 = vadd.f32 %v1998, %v2122
    %v2124 = vpop.f32.mrb[0].mxu0
    %v2125 = vpop.f32.mrb[0].mxu0
    %v2126 = vadd.f32 %v1998, %v2125
    %v2127 = vpop.f32.mrb[0].mxu0
    %2128 = vmatprep.mubr.bf16.mxu0 0
    %2129 = vmatmul.mubr.bf16.gmra.mrb[0].mxu0 %v1967
    %v2130 = vpop.f32.mrb[0].mxu0
    %v2131 = vadd.f32 %v1998, %v2130
    %v2132 = vpop.f32.mrb[0].mxu0
    %v2133 = vpop.f32.mrb[0].mxu0
    %v2134 = vadd.f32 %v1998, %v2133
    %v2135 = vpop.f32.mrb[0].mxu0
    %2136 = vmatprep.mubr.bf16.mxu0 0
    %2137 = vmatmul.mubr.bf16.gmra.mrb[0].mxu0 %v1968
    %v2138 = vpop.f32.mrb[0].mxu0
    %v2139 = vadd.f32 %v1998, %v2138
    %v2140 = vpop.f32.mrb[0].mxu0
    %v2141 = vpop.f32.mrb[0].mxu0
    %v2142 = vadd.f32 %v1998, %v2141
    %v2143 = vpop.f32.mrb[0].mxu0
    %2144 = vmatprep.mubr.bf16.mxu0 0
    %2145 = vmatmul.mubr.bf16.gmra.mrb[0].mxu0 %v1969
    %v2146 = vpop.f32.mrb[0].mxu0
    %v2147 = vadd.f32 %v1998, %v2146
    %v2148 = vpop.f32.mrb[0].mxu0
    %v2149 = vpop.f32.mrb[0].mxu0
    %v2150 = vadd.f32 %v1998, %v2149
    %v2151 = vpop.f32.mrb[0].mxu0
    %2152 = vmatprep.mubr.bf16.mxu0 0
    %2153 = vmatmul.mubr.bf16.gmra.mrb[0].mxu0 %v1970
    %v2154 = vpop.f32.mrb[0].mxu0
    %v2155 = vadd.f32 %v1998, %v2154
    %v2156 = vpop.f32.mrb[0].mxu0
    %v2157 = vpop.f32.mrb[0].mxu0
    %v2158 = vadd.f32 %v1998, %v2157
    %v2159 = vpop.f32.mrb[0].mxu0
    %2160 = vmatprep.mubr.bf16.mxu0 0
    %2161 = vmatmul.mubr.bf16.gmra.mrb[0].mxu0 %v1971
    %v2162 = vpop.f32.mrb[0].mxu0
    %v2163 = vadd.f32 %v1998, %v2162
    %v2164 = vpop.f32.mrb[0].mxu0
    %v2165 = vpop.f32.mrb[0].mxu0
    %v2166 = vadd.f32 %v1998, %v2165
    %v2167 = vpop.f32.mrb[0].mxu0
    %2168 = vmatprep.mubr.bf16.mxu0 0
    %2169 = vmatmul.mubr.bf16.gmra.mrb[0].mxu0 %v1972
    %v2170 = vpop.f32.mrb[0].mxu0
    %v2171 = vadd.f32 %v1998, %v2170
    %v2172 = vpop.f32.mrb[0].mxu0
    %v2173 = vpop.f32.mrb[0].mxu0
    %v2174 = vadd.f32 %v1998, %v2173
    %v2175 = vpop.f32.mrb[0].mxu0
    %2176 = vmatprep.mubr.bf16.mxu0 0
    %2177 = vmatmul.mubr.bf16.gmra.mrb[0].mxu0 %v1973
    %v2178 = vpop.f32.mrb[0].mxu0
    %v2179 = vadd.f32 %v1998, %v2178
    %v2180 = vpop.f32.mrb[0].mxu0
    %v2181 = vpop.f32.mrb[0].mxu0
    %v2182 = vadd.f32 %v1998, %v2181
    %v2183 = vpop.f32.mrb[0].mxu0
    %2184 = vmatprep.mubr.bf16.mxu0 0
    %2185 = vmatmul.mubr.bf16.gmra.mrb[0].mxu0 %v1974
    %v2186 = vpop.f32.mrb[0].mxu0
    %v2187 = vadd.f32 %v1998, %v2186
    %v2188 = vpop.f32.mrb[0].mxu0
    %v2189 = vpop.f32.mrb[0].mxu0
    %v2190 = vadd.f32 %v1998, %v2189
    %v2191 = vpop.f32.mrb[0].mxu0
    %2192 = vmatprep.mubr.bf16.mxu0 0
    %2193 = vmatmul.mubr.bf16.gmra.mrb[0].mxu0 %v1975
    %v2194 = vpop.f32.mrb[0].mxu0
    %v2195 = vadd.f32 %v1998, %v2194
    %v2196 = vpop.f32.mrb[0].mxu0
    %v2197 = vpop.f32.mrb[0].mxu0
    %v2198 = vadd.f32 %v1998, %v2197
    %v2199 = vpop.f32.mrb[0].mxu0
    %2200 = vmatprep.mubr.bf16.mxu0 0
    %2201 = vmatmul.mubr.bf16.gmra.mrb[0].mxu0 %v1976
    %v2202 = vpop.f32.mrb[0].mxu0
    %v2203 = vadd.f32 %v1998, %v2202
    %v2204 = vpop.f32.mrb[0].mxu0
    %v2205 = vpop.f32.mrb[0].mxu0
    %v2206 = vadd.f32 %v1998, %v2205
    %v2207 = vpop.f32.mrb[0].mxu0
    %2208 = vdwg.mxu0
    %v2209 = vmax.f32 %v2083, 0.0
    %v2210 = vmax.f32 %v2086, 0.0
    %v2211 = vmax.f32 %v2091, 0.0
    %v2212 = vmax.f32 %v2094, 0.0
    %v2213 = vmax.f32 %v2099, 0.0
    %v2214 = vmax.f32 %v2102, 0.0
    %v2215 = vmax.f32 %v2107, 0.0
    %v2216 = vmax.f32 %v2110, 0.0
    %v2217 = vmax.f32 %v2115, 0.0
    %v2218 = vmax.f32 %v2118, 0.0
    %v2219 = vmax.f32 %v2123, 0.0
    %v2220 = vmax.f32 %v2126, 0.0
    %v2221 = vmax.f32 %v2131, 0.0
    %v2222 = vmax.f32 %v2134, 0.0
    %v2223 = vmax.f32 %v2139, 0.0
    %v2224 = vmax.f32 %v2142, 0.0
    %v2225 = vmax.f32 %v2147, 0.0
    %v2226 = vmax.f32 %v2150, 0.0
    %v2227 = vmax.f32 %v2155, 0.0
    %v2228 = vmax.f32 %v2158, 0.0
    %v2229 = vmax.f32 %v2163, 0.0
    %v2230 = vmax.f32 %v2166, 0.0
    %v2231 = vmax.f32 %v2171, 0.0
    %v2232 = vmax.f32 %v2174, 0.0
    %v2233 = vmax.f32 %v2179, 0.0
    %v2234 = vmax.f32 %v2182, 0.0
    %v2235 = vmax.f32 %v2187, 0.0
    %v2236 = vmax.f32 %v2190, 0.0
    %v2237 = vmax.f32 %v2195, 0.0
    %v2238 = vmax.f32 %v2198, 0.0
    %v2239 = vmax.f32 %v2203, 0.0
    %v2240 = vmax.f32 %v2206, 0.0
    %v2241 = vmul.f32 %v2209, %v890
    %v2242 = vmul.f32 %v2210, %v895
    %v2243 = vmul.f32 %v2211, %v900
    %v2244 = vmul.f32 %v2212, %v905
    %v2245 = vmul.f32 %v2213, %v910
    %v2246 = vmul.f32 %v2214, %v915
    %v2247 = vmul.f32 %v2215, %v920
    %v2248 = vmul.f32 %v2216, %v925
    %v2249 = vmul.f32 %v2217, %v930
    %v2250 = vmul.f32 %v2218, %v935
    %v2251 = vmul.f32 %v2219, %v940
    %v2252 = vmul.f32 %v2220, %v945
    %v2253 = vmul.f32 %v2221, %v950
    %v2254 = vmul.f32 %v2222, %v955
    %v2255 = vmul.f32 %v2223, %v960
    %v2256 = vmul.f32 %v2224, %v965
    %v2257 = vmul.f32 %v2225, %v970
    %v2258 = vmul.f32 %v2226, %v975
    %v2259 = vmul.f32 %v2227, %v980
    %v2260 = vmul.f32 %v2228, %v985
    %v2261 = vmul.f32 %v2229, %v990
    %v2262 = vmul.f32 %v2230, %v995
    %v2263 = vmul.f32 %v2231, %v1000
    %v2264 = vmul.f32 %v2232, %v1005
    %v2265 = vmul.f32 %v2233, %v1010
    %v2266 = vmul.f32 %v2234, %v1015
    %v2267 = vmul.f32 %v2235, %v1020
    %v2268 = vmul.f32 %v2236, %v1025
    %v2269 = vmul.f32 %v2237, %v1030
    %v2270 = vmul.f32 %v2238, %v1035
    %v2271 = vmul.f32 %v2239, %v1040
    %v2272 = vmul.f32 %v2240, %v1045
    %v2273 = vpack.c.bf16 %v2242, %v2241
    %v2274 = vpack.c.bf16 %v2244, %v2243
    %v2275 = vpack.c.bf16 %v2246, %v2245
    %v2276 = vpack.c.bf16 %v2248, %v2247
    %v2277 = vpack.c.bf16 %v2250, %v2249
    %v2278 = vpack.c.bf16 %v2252, %v2251
    %v2279 = vpack.c.bf16 %v2254, %v2253
    %v2280 = vpack.c.bf16 %v2256, %v2255
    %v2281 = vpack.c.bf16 %v2258, %v2257
    %v2282 = vpack.c.bf16 %v2260, %v2259
    %v2283 = vpack.c.bf16 %v2262, %v2261
    %v2284 = vpack.c.bf16 %v2264, %v2263
    %v2285 = vpack.c.bf16 %v2266, %v2265
    %v2286 = vpack.c.bf16 %v2268, %v2267
    %v2287 = vpack.c.bf16 %v2270, %v2269
    %v2288 = vpack.c.bf16 %v2272, %v2271
    %v2289 = vld [vmem:[#allocation6] sm:$0xf]
    %v2290 = vld [vmem:[#allocation6 + $0x4] sm:$0xf]
    %v2291 = vld [vmem:[#allocation6 + $0x8] sm:$0xf]
    %v2292 = vld [vmem:[#allocation6 + $0xc] sm:$0xf]
    %v2293 = vld [vmem:[#allocation6 + $0x10] sm:$0xf]
    %v2294 = vld [vmem:[#allocation6 + $0x14] sm:$0xf]
    %v2295 = vld [vmem:[#allocation6 + $0x18] sm:$0xf]
    %v2296 = vld [vmem:[#allocation6 + $0x1c] sm:$0xf]
    %v2297 = vld [vmem:[#allocation6 + $0x20] sm:$0xf]
    %v2298 = vld [vmem:[#allocation6 + $0x24] sm:$0xf]
    %v2299 = vld [vmem:[#allocation6 + $0x28] sm:$0xf]
    %v2300 = vld [vmem:[#allocation6 + $0x2c] sm:$0xf]
    %v2301 = vld [vmem:[#allocation6 + $0x30] sm:$0xf]
    %v2302 = vld [vmem:[#allocation6 + $0x34] sm:$0xf]
    %v2303 = vld [vmem:[#allocation6 + $0x38] sm:$0xf]
    %v2304 = vld [vmem:[#allocation6 + $0x3c] sm:$0xf]
    %v2321 = vunpack.c.l.b16 %v2289
    %v2322 = vunpack.c.l.b16 %v2290
    %v2323 = vunpack.c.l.b16 %v2291
    %v2324 = vunpack.c.l.b16 %v2292
    %v2325 = vunpack.c.l.b16 %v2293
    %v2326 = vunpack.c.l.b16 %v2294
    %v2327 = vunpack.c.l.b16 %v2295
    %v2328 = vunpack.c.l.b16 %v2296
    %v2329 = vunpack.c.l.b16 %v2297
    %v2330 = vunpack.c.l.b16 %v2298
    %v2331 = vunpack.c.l.b16 %v2299
    %v2332 = vunpack.c.l.b16 %v2300
    %v2333 = vunpack.c.l.b16 %v2301
    %v2334 = vunpack.c.l.b16 %v2302
    %v2335 = vunpack.c.l.b16 %v2303
    %v2336 = vunpack.c.l.b16 %v2304
    %v2337 = vpack.c.b16 %v2322, %v2321
    %v2338 = vpack.c.b16 %v2324, %v2323
    %v2339 = vpack.c.b16 %v2326, %v2325
    %v2340 = vpack.c.b16 %v2328, %v2327
    %v2341 = vpack.c.b16 %v2330, %v2329
    %v2342 = vpack.c.b16 %v2332, %v2331
    %v2343 = vpack.c.b16 %v2334, %v2333
    %v2344 = vpack.c.b16 %v2336, %v2335
    %2353 = vmatprep.subr.bf16.mxu0 0
    %2354 = vmatpush1.bf16.msra.mxu0 %v2337
    %2355 = vmatprep.subr.bf16.mxu0 0
    %2356 = vmatpush1.bf16.msra.mxu0 %v2338
    %2357 = vmatprep.subr.bf16.mxu0 0
    %2358 = vmatpush1.bf16.msra.mxu0 %v2339
    %2359 = vmatprep.subr.bf16.mxu0 0
    %2360 = vmatpush1.bf16.msra.mxu0 %v2340
    %2361 = vmatprep.subr.bf16.mxu0 0
    %2362 = vmatpush1.bf16.msra.mxu0 %v2341
    %2363 = vmatprep.subr.bf16.mxu0 0
    %2364 = vmatpush1.bf16.msra.mxu0 %v2342
    %2365 = vmatprep.subr.bf16.mxu0 0
    %2366 = vmatpush1.bf16.msra.mxu0 %v2343
    %2367 = vmatprep.subr.bf16.mxu0 0
    %2368 = vmatpush1.bf16.msra.mxu0 %v2344
    %2369 = vmatprep.subr.bf16.mxu0 0
    %2370 = vmatpush1.bf16.msra.mxu0 0
    %2371 = vmatprep.subr.bf16.mxu0 0
    %2372 = vmatpush1.bf16.msra.mxu0 0
    %2373 = vmatprep.subr.bf16.mxu0 0
    %2374 = vmatpush1.bf16.msra.mxu0 0
    %2375 = vmatprep.subr.bf16.mxu0 0
    %2376 = vmatpush1.bf16.msra.mxu0 0
    %2377 = vmatprep.subr.bf16.mxu0 0
    %2378 = vmatpush1.bf16.msra.mxu0 0
    %2379 = vmatprep.subr.bf16.mxu0 0
    %2380 = vmatpush1.bf16.msra.mxu0 0
    %2381 = vmatprep.subr.bf16.mxu0 0
    %2382 = vmatpush1.bf16.msra.mxu0 0
    %2383 = vmatprep.subr.bf16.mxu0 0
    %2384 = vmatpush1.bf16.msra.mxu0 0
    %2385 = vmatprep.mubr.bf16.mxu0 0
    %2386 = vmatmul.mubr.bf16.gmra.mrb[0].mxu0 %v2273
    %v2387 = vpop.f32.mrb[0].mxu0
    %v2388 = vadd.f32 %v1131, %v2387
    %v2389 = vpop.f32.mrb[0].mxu0
    %v2390 = vpop.f32.mrb[0].mxu0
    %v2391 = vadd.f32 %v1136, %v2390
    %v2392 = vpop.f32.mrb[0].mxu0
    %2393 = vmatprep.mubr.bf16.mxu0 0
    %2394 = vmatmul.mubr.bf16.gmra.mrb[0].mxu0 %v2274
    %v2395 = vpop.f32.mrb[0].mxu0
    %v2396 = vadd.f32 %v1141, %v2395
    %v2397 = vpop.f32.mrb[0].mxu0
    %v2398 = vpop.f32.mrb[0].mxu0
    %v2399 = vadd.f32 %v1146, %v2398
    %v2400 = vpop.f32.mrb[0].mxu0
    %2401 = vmatprep.mubr.bf16.mxu0 0
    %2402 = vmatmul.mubr.bf16.gmra.mrb[0].mxu0 %v2275
    %v2403 = vpop.f32.mrb[0].mxu0
    %v2404 = vadd.f32 %v1151, %v2403
    %v2405 = vpop.f32.mrb[0].mxu0
    %v2406 = vpop.f32.mrb[0].mxu0
    %v2407 = vadd.f32 %v1156, %v2406
    %v2408 = vpop.f32.mrb[0].mxu0
    %2409 = vmatprep.mubr.bf16.mxu0 0
    %2410 = vmatmul.mubr.bf16.gmra.mrb[0].mxu0 %v2276
    %v2411 = vpop.f32.mrb[0].mxu0
    %v2412 = vadd.f32 %v1161, %v2411
    %v2413 = vpop.f32.mrb[0].mxu0
    %v2414 = vpop.f32.mrb[0].mxu0
    %v2415 = vadd.f32 %v1166, %v2414
    %v2416 = vpop.f32.mrb[0].mxu0
    %2417 = vmatprep.mubr.bf16.mxu0 0
    %2418 = vmatmul.mubr.bf16.gmra.mrb[0].mxu0 %v2277
    %v2419 = vpop.f32.mrb[0].mxu0
    %v2420 = vadd.f32 %v1171, %v2419
    %v2421 = vpop.f32.mrb[0].mxu0
    %v2422 = vpop.f32.mrb[0].mxu0
    %v2423 = vadd.f32 %v1176, %v2422
    %v2424 = vpop.f32.mrb[0].mxu0
    %2425 = vmatprep.mubr.bf16.mxu0 0
    %2426 = vmatmul.mubr.bf16.gmra.mrb[0].mxu0 %v2278
    %v2427 = vpop.f32.mrb[0].mxu0
    %v2428 = vadd.f32 %v1181, %v2427
    %v2429 = vpop.f32.mrb[0].mxu0
    %v2430 = vpop.f32.mrb[0].mxu0
    %v2431 = vadd.f32 %v1186, %v2430
    %v2432 = vpop.f32.mrb[0].mxu0
    %2433 = vmatprep.mubr.bf16.mxu0 0
    %2434 = vmatmul.mubr.bf16.gmra.mrb[0].mxu0 %v2279
    %v2435 = vpop.f32.mrb[0].mxu0
    %v2436 = vadd.f32 %v1191, %v2435
    %v2437 = vpop.f32.mrb[0].mxu0
    %v2438 = vpop.f32.mrb[0].mxu0
    %v2439 = vadd.f32 %v1196, %v2438
    %v2440 = vpop.f32.mrb[0].mxu0
    %2441 = vmatprep.mubr.bf16.mxu0 0
    %2442 = vmatmul.mubr.bf16.gmra.mrb[0].mxu0 %v2280
    %v2443 = vpop.f32.mrb[0].mxu0
    %v2444 = vadd.f32 %v1201, %v2443
    %v2445 = vpop.f32.mrb[0].mxu0
    %v2446 = vpop.f32.mrb[0].mxu0
    %v2447 = vadd.f32 %v1206, %v2446
    %v2448 = vpop.f32.mrb[0].mxu0
    %2449 = vmatprep.mubr.bf16.mxu0 0
    %2450 = vmatmul.mubr.bf16.gmra.mrb[0].mxu0 %v2281
    %v2451 = vpop.f32.mrb[0].mxu0
    %v2452 = vadd.f32 %v1211, %v2451
    %v2453 = vpop.f32.mrb[0].mxu0
    %v2454 = vpop.f32.mrb[0].mxu0
    %v2455 = vadd.f32 %v1216, %v2454
    %v2456 = vpop.f32.mrb[0].mxu0
    %2457 = vmatprep.mubr.bf16.mxu0 0
    %2458 = vmatmul.mubr.bf16.gmra.mrb[0].mxu0 %v2282
    %v2459 = vpop.f32.mrb[0].mxu0
    %v2460 = vadd.f32 %v1221, %v2459
    %v2461 = vpop.f32.mrb[0].mxu0
    %v2462 = vpop.f32.mrb[0].mxu0
    %v2463 = vadd.f32 %v1226, %v2462
    %v2464 = vpop.f32.mrb[0].mxu0
    %2465 = vmatprep.mubr.bf16.mxu0 0
    %2466 = vmatmul.mubr.bf16.gmra.mrb[0].mxu0 %v2283
    %v2467 = vpop.f32.mrb[0].mxu0
    %v2468 = vadd.f32 %v1231, %v2467
    %v2469 = vpop.f32.mrb[0].mxu0
    %v2470 = vpop.f32.mrb[0].mxu0
    %v2471 = vadd.f32 %v1236, %v2470
    %v2472 = vpop.f32.mrb[0].mxu0
    %2473 = vmatprep.mubr.bf16.mxu0 0
    %2474 = vmatmul.mubr.bf16.gmra.mrb[0].mxu0 %v2284
    %v2475 = vpop.f32.mrb[0].mxu0
    %v2476 = vadd.f32 %v1241, %v2475
    %v2477 = vpop.f32.mrb[0].mxu0
    %v2478 = vpop.f32.mrb[0].mxu0
    %v2479 = vadd.f32 %v1246, %v2478
    %v2480 = vpop.f32.mrb[0].mxu0
    %2481 = vmatprep.mubr.bf16.mxu0 0
    %2482 = vmatmul.mubr.bf16.gmra.mrb[0].mxu0 %v2285
    %v2483 = vpop.f32.mrb[0].mxu0
    %v2484 = vadd.f32 %v1251, %v2483
    %v2485 = vpop.f32.mrb[0].mxu0
    %v2486 = vpop.f32.mrb[0].mxu0
    %v2487 = vadd.f32 %v1256, %v2486
    %v2488 = vpop.f32.mrb[0].mxu0
    %2489 = vmatprep.mubr.bf16.mxu0 0
    %2490 = vmatmul.mubr.bf16.gmra.mrb[0].mxu0 %v2286
    %v2491 = vpop.f32.mrb[0].mxu0
    %v2492 = vadd.f32 %v1261, %v2491
    %v2493 = vpop.f32.mrb[0].mxu0
    %v2494 = vpop.f32.mrb[0].mxu0
    %v2495 = vadd.f32 %v1266, %v2494
    %v2496 = vpop.f32.mrb[0].mxu0
    %2497 = vmatprep.mubr.bf16.mxu0 0
    %2498 = vmatmul.mubr.bf16.gmra.mrb[0].mxu0 %v2287
    %v2499 = vpop.f32.mrb[0].mxu0
    %v2500 = vadd.f32 %v1271, %v2499
    %v2501 = vpop.f32.mrb[0].mxu0
    %v2502 = vpop.f32.mrb[0].mxu0
    %v2503 = vadd.f32 %v1276, %v2502
    %v2504 = vpop.f32.mrb[0].mxu0
    %2505 = vmatprep.mubr.bf16.mxu0 0
    %2506 = vmatmul.mubr.bf16.gmra.mrb[0].mxu0 %v2288
    %v2507 = vpop.f32.mrb[0].mxu0
    %v2508 = vadd.f32 %v1281, %v2507
    %v2509 = vpop.f32.mrb[0].mxu0
    %v2510 = vpop.f32.mrb[0].mxu0
    %v2511 = vadd.f32 %v1286, %v2510
    %v2512 = vpop.f32.mrb[0].mxu0
    %2513 = vdwg.mxu0
    %2514 = vst [vmem:[%s12] sm:$0xff] %v2388
    %2515 = vst [vmem:[%s12 + $0x8] sm:$0xff] %v2391
    %2516 = vst [vmem:[%s12 + $0x10] sm:$0xff] %v2396
    %2517 = vst [vmem:[%s12 + $0x18] sm:$0xff] %v2399
    %2518 = vst [vmem:[%s12 + $0x20] sm:$0xff] %v2404
    %2519 = vst [vmem:[%s12 + $0x28] sm:$0xff] %v2407
    %2520 = vst [vmem:[%s12 + $0x30] sm:$0xff] %v2412
    %2521 = vst [vmem:[%s12 + $0x38] sm:$0xff] %v2415
    %2522 = vst [vmem:[%s12 + $0x40] sm:$0xff] %v2420
    %2523 = vst [vmem:[%s12 + $0x48] sm:$0xff] %v2423
    %2524 = vst [vmem:[%s12 + $0x50] sm:$0xff] %v2428
    %2525 = vst [vmem:[%s12 + $0x58] sm:$0xff] %v2431
    %2526 = vst [vmem:[%s12 + $0x60] sm:$0xff] %v2436
    %2527 = vst [vmem:[%s12 + $0x68] sm:$0xff] %v2439
    %2528 = vst [vmem:[%s12 + $0x70] sm:$0xff] %v2444
    %2529 = vst [vmem:[%s12 + $0x78] sm:$0xff] %v2447
    %2530 = vst [vmem:[%s12 + $0x80] sm:$0xff] %v2452
    %2531 = vst [vmem:[%s12 + $0x88] sm:$0xff] %v2455
    %2532 = vst [vmem:[%s12 + $0x90] sm:$0xff] %v2460
    %2533 = vst [vmem:[%s12 + $0x98] sm:$0xff] %v2463
    %2534 = vst [vmem:[%s12 + $0xa0] sm:$0xff] %v2468
    %2535 = vst [vmem:[%s12 + $0xa8] sm:$0xff] %v2471
    %2536 = vst [vmem:[%s12 + $0xb0] sm:$0xff] %v2476
    %2537 = vst [vmem:[%s12 + $0xb8] sm:$0xff] %v2479
    %2538 = vst [vmem:[%s12 + $0xc0] sm:$0xff] %v2484
    %2539 = vst [vmem:[%s12 + $0xc8] sm:$0xff] %v2487
    %2540 = vst [vmem:[%s12 + $0xd0] sm:$0xff] %v2492
    %2541 = vst [vmem:[%s12 + $0xd8] sm:$0xff] %v2495
    %2542 = vst [vmem:[%s12 + $0xe0] sm:$0xff] %v2500
    %2543 = vst [vmem:[%s12 + $0xe8] sm:$0xff] %v2503
    %2544 = vst [vmem:[%s12 + $0xf0] sm:$0xff] %v2508
    %2545 = vst [vmem:[%s12 + $0xf8] sm:$0xff] %v2511
    // Predicated region
    $region62: #{mmoe_pallas.1} parent=1 // pred_check
      _
    $region63: #{mmoe_pallas.1} parent=1 // pred_check_branch
      %2547 = sbr.rel (0) target = $region65
    $region64: #{mmoe_pallas.1} parent=1 // pred_region
      _
    $region65: #{mmoe_pallas.1} parent=1 // pred_fallthru
      _
    // Predicated region
    $region66: #{mmoe_pallas.1} parent=1 // pred_check
      _
    $region67: #{mmoe_pallas.1} parent=1 // pred_check_branch
      %2549 = sbr.rel (0) target = $region69
    $region68: #{mmoe_pallas.1} parent=1 // pred_region
      _
    $region69: #{mmoe_pallas.1} parent=1 // pred_fallthru
      _
    %2550 = vsyncpa [#allocation3], 1
    %2551 = vsyncpa [#allocation5], 1

</llo_original>
